<compile_context>
chip_gen: v5e
topology: v5e:2x2
jax: 0.10.0
libtpu: 0.0.40
codegen_flags: <defaults>
</compile_context>

<pallas_src>
import functools
import math

import jax
import jax.numpy as jnp
from jax import lax
from jax.experimental import pallas as pl
from jax.experimental.pallas import tpu as pltpu


def _rnn_kernel(x_ref, h0_ref, wih_ref, whh_ref, b_ref, out_ref, h_acc, pre_ref,
                *, t_chunk):
    """One (batch_tile, time_chunk) grid step.

    x_ref   : (t_chunk, bt, isz)  time-major input slab
    h0_ref  : (bt, hp)            initial hidden state
    wih_ref : (isz, hp)           W_ih^T  (VMEM resident, constant block index)
    whh_ref : (hp, hp)            W_hh^T  (VMEM resident, constant block index)
    b_ref   : (1, hp)             folded bias (b_ih + b_hh), f32
    out_ref : (t_chunk, bt, hp)   time-major output slab
    h_acc   : (bt, hp) f32        carried hidden state (scratch, persists over time axis)
    pre_ref : (t_chunk, bt, hp)   f32 scratch for the hoisted input projection
    """
    t = pl.program_id(1)

    # (Re)initialize the carried hidden state at the start of each batch tile's sweep.
    @pl.when(t == 0)
    def _():
        h_acc[...] = h0_ref[...].astype(jnp.float32)

    w_dtype = whh_ref.dtype
    tc, bt, isz = x_ref.shape
    hp = whh_ref.shape[1]

    # Hoisted input projection: one large MXU-friendly matmul (M = t_chunk * bt rows),
    # written time-major so every per-step read below is a dense (bt, hp) tile.
    x2d = x_ref[...].reshape(tc * bt, isz).astype(w_dtype)
    pre2d = jnp.dot(x2d, wih_ref[...],
                    preferred_element_type=jnp.float32) + b_ref[...]
    pre_ref[...] = pre2d.reshape(tc, bt, hp)
    # TODO(synk): interleave the projection in small sub-slabs with the recurrence
    # (latency hiding when the batch tile is tiny) and keep W_hh staged in MXU weight
    # registers via pltpu.matmul_push_rhs / matmul_acc_lhs for large hidden sizes.

    # Serial recurrence: only  h @ W_hh^T + pre[t] + tanh  per step.  fori_loop with a
    # bounded unroll keeps vreg live ranges small while retaining LLO visibility.
    def step(k, h):
        rec = jnp.dot(h.astype(w_dtype), whh_ref[...],
                      preferred_element_type=jnp.float32)
        h = jnp.tanh(pre_ref[k] + rec)
        out_ref[k] = h.astype(out_ref.dtype)          # lane-dense (bt, hp) store
        return h

    h_acc[...] = lax.fori_loop(0, t_chunk, step, h_acc[...],
                               unroll=min(8, t_chunk))


def _round_up(n, m):
    return ((n + m - 1) // m) * m


def _pick_batch_tile(bs):
    # Keep the whole batch on one tile: the recurrence matmul's M dim equals the batch
    # tile and the MXU is 128/256 wide, so splitting the batch only underfills it and
    # adds per-grid-step overhead on single-TensorCore chips.  Only split when each
    # half stays large (>=128 rows, sublane aligned).
    # TODO(synk): on v7x (2 TensorCores) use pltpu.CORE_PARALLEL / pl.core_map on the
    # batch axis when it is split, so the second core actually gets work.
    if bs >= 256 and bs % 2 == 0 and (bs // 2) % 8 == 0:
        return bs // 2
    return bs


def _vmem_bytes(t_chunk, bt, isz, hp, x_item, out_item, w_item, single_buf_weights):
    wmul = 1 if single_buf_weights else 2
    weights = wmul * (isz * hp + hp * hp + 8 * hp) * w_item       # W_ih^T, W_hh^T, bias
    h0 = 2 * bt * hp * x_item                                     # double-buffered h0
    xblk = 2 * t_chunk * bt * isz * x_item                        # double-buffered x slab
    oblk = 2 * t_chunk * bt * hp * out_item                       # double-buffered out slab
    pre = 2 * t_chunk * bt * hp * 4                               # pre scratch + dot transient
    hacc = bt * hp * 4
    return weights + h0 + xblk + oblk + pre + hacc


def _pick_time_chunk(seq, bt, isz, hp, x_item, out_item, w_item, budget):
    # Largest multiple-of-8 chunk that fits the VMEM budget, scored to balance padded
    # (wasted) recurrence steps against per-grid-step overhead.
    seq8 = _round_up(max(seq, 1), 8)
    best, best_score = 8, None
    for c in (128, 96, 64, 48, 32, 24, 16, 8):
        if c > seq8:
            continue
        if _vmem_bytes(c, bt, isz, hp, x_item, out_item, w_item, True) > 0.9 * budget:
            continue
        padded = _round_up(seq, c)
        score = (padded - seq) + 4 * (padded // c)
        if best_score is None or score < best_score:
            best, best_score = c, score
    return best


def rnn_layer_pallas(x, hidden, w_ih, b_ih, w_hh, b_hh, *, weights_dtype=None):
    """x: (batch, seq, input_size); hidden: (batch, hidden_size) or None.

    Returns (output, final_hidden) matching the PyTorch RNNLayer semantics, including
    the torch.cat(dim=0).view(bs, seq, H) memory reinterpretation.
    weights_dtype=jnp.bfloat16 enables bf16 weights / MXU (f32 accumulation; hidden
    state and tanh stay f32) — recommended on v5e / v7x.
    """
    bs, seq, isz = x.shape
    hsz = w_ih.shape[0]
    out_dtype = x.dtype
    if hidden is None:
        hidden = jnp.zeros((bs, hsz), dtype=x.dtype)
    w_dtype = (jnp.dtype(weights_dtype) if weights_dtype is not None
               else jnp.dtype(x.dtype))

    # Lane-dense padded hidden width (multiple of 128).  Padded weight/bias/h0 lanes
    # are zero, so padded hidden lanes stay tanh(0)=0 and never feed real lanes.
    hp = _round_up(hsz, 128)
    pad_h = hp - hsz

    wih_t = jnp.transpose(w_ih).astype(w_dtype)                   # (isz, H)
    whh_t = jnp.transpose(w_hh).astype(w_dtype)                   # (H, H)
    bias = (b_ih.astype(jnp.float32) + b_hh.astype(jnp.float32)).reshape(1, hsz)
    h0 = hidden.astype(x.dtype)
    if pad_h:
        wih_t = jnp.pad(wih_t, ((0, 0), (0, pad_h)))
        whh_t = jnp.pad(whh_t, ((0, pad_h), (0, pad_h)))
        bias = jnp.pad(bias, ((0, 0), (0, pad_h)))
        h0 = jnp.pad(h0, ((0, 0), (0, pad_h)))

    # Time-major x so the in-kernel projection, its per-step reads and the output
    # stores are all lane/sublane dense (no strided vloads on the serial path).
    x_tm = jnp.transpose(x, (1, 0, 2))                            # (seq, bs, isz)

    # Per-generation VMEM budget with headroom (v5e/v6e ~128 MiB, v7x ~64 MiB physical).
    try:
        vmem_cap = int(getattr(pltpu.get_tpu_info(), "vmem_capacity_bytes",
                               64 * 2 ** 20))
    except Exception:
        vmem_cap = 64 * 2 ** 20
    budget = max(vmem_cap - 16 * 2 ** 20, 32 * 2 ** 20)

    x_item = jnp.dtype(x.dtype).itemsize
    out_item = jnp.dtype(out_dtype).itemsize
    w_item = jnp.dtype(w_dtype).itemsize

    b_tile = _pick_batch_tile(bs)
    n_bt = bs // b_tile
    t_chunk = _pick_time_chunk(seq, b_tile, isz, hp, x_item, out_item, w_item, budget)

    # Pad the sequence to a multiple of t_chunk: padded steps produce unused rows that
    # are sliced off below; the final hidden is read from the last REAL step.
    seq_pad = _round_up(seq, t_chunk)
    if seq_pad != seq:
        x_tm = jnp.pad(x_tm, ((0, seq_pad - seq), (0, 0), (0, 0)))
    n_tc = seq_pad // t_chunk

    # TODO(synk): for very large hidden sizes where W_hh^T alone exceeds the VMEM
    # budget, W_hh would additionally need K-tiling inside the recurrence loop.

    kernel = functools.partial(_rnn_kernel, t_chunk=t_chunk)

    def build(single_buf_weights):
        const = (dict(pipeline_mode=pl.Buffered(1)) if single_buf_weights else {})
        in_specs = [
            pl.BlockSpec((t_chunk, b_tile, isz), lambda b, t: (t, b, 0)),   # x slab
            pl.BlockSpec((b_tile, hp), lambda b, t: (b, 0)),                # h0
            pl.BlockSpec((isz, hp), lambda b, t: (0, 0), **const),          # W_ih^T
            pl.BlockSpec((hp, hp), lambda b, t: (0, 0), **const),           # W_hh^T
            pl.BlockSpec((1, hp), lambda b, t: (0, 0), **const),            # folded bias
        ]
        return pl.pallas_call(
            kernel,
            out_shape=jax.ShapeDtypeStruct((seq_pad, bs, hp), out_dtype),
            grid_spec=pltpu.PrefetchScalarGridSpec(
                num_scalar_prefetch=0,
                grid=(n_bt, n_tc),
                in_specs=in_specs,
                out_specs=pl.BlockSpec((t_chunk, b_tile, hp),
                                       lambda b, t: (t, b, 0)),
                scratch_shapes=[
                    pltpu.VMEM((b_tile, hp), jnp.float32),            # carried hidden
                    pltpu.VMEM((t_chunk, b_tile, hp), jnp.float32),   # pre-activations
                ],
            ),
            compiler_params=pltpu.CompilerParams(
                dimension_semantics=("parallel", "arbitrary"),
                vmem_limit_bytes=int(budget)),
        )

    try:
        out_stacked = build(True)(x_tm, h0, wih_t, whh_t, bias)
    except Exception:
        # Fallback if single-buffering via pl.Buffered(1) is rejected by this
        # JAX/Mosaic version: default double buffering of the resident weights.
        out_stacked = build(False)(x_tm, h0, wih_t, whh_t, bias)

    out_tm = out_stacked
    if seq_pad != seq:
        out_tm = out_tm[:seq]
    if pad_h:
        out_tm = out_tm[:, :, :hsz]
    # torch.cat(output, dim=0).view(bs, seq, H): pure memory reinterpretation of the
    # time-major stack (no-op slices above when hsz % 128 == 0 and seq % t_chunk == 0).
    output = out_tm.reshape(bs, seq, hsz)
    h_final = out_tm[seq - 1]                  # last real timestep == final hidden
    return output, h_final


def rnn_layer_ref(x, hidden, w_ih, b_ih, w_hh, b_hh):
    """Pure-JAX reference mirroring the PyTorch loop exactly."""
    bs, seq, _ = x.shape
    hsz = w_ih.shape[0]
    h = jnp.zeros((bs, hsz), x.dtype) if hidden is None else hidden
    hs = []
    for t in range(seq):
        x_t = x[:, t, :]
        h = jnp.tanh(x_t @ w_ih.T + b_ih + h @ w_hh.T + b_hh)
        hs.append(h)
    stacked = jnp.concatenate(hs, axis=0)             # (seq*bs, H) time-major
    output = stacked.reshape(bs, seq, hsz)            # same as torch .view
    return output, h


if __name__ == "__main__":
    batch, seq_len, input_size, hidden_size = 2, 8, 16, 32

    key = jax.random.PRNGKey(0)
    kx, k1, k2, k3, k4 = jax.random.split(key, 5)

    x = jax.random.normal(kx, (batch, seq_len, input_size), dtype=jnp.float32)

    # Deterministic parameter init (same shapes as nn.Linear; uniform like PyTorch).
    bound_ih = 1.0 / math.sqrt(input_size)
    bound_hh = 1.0 / math.sqrt(hidden_size)
    w_ih = jax.random.uniform(k1, (hidden_size, input_size), jnp.float32,
                              -bound_ih, bound_ih)
    b_ih = jax.random.uniform(k2, (hidden_size,), jnp.float32, -bound_ih, bound_ih)
    w_hh = jax.random.uniform(k3, (hidden_size, hidden_size), jnp.float32,
                              -bound_hh, bound_hh)
    b_hh = jax.random.uniform(k4, (hidden_size,), jnp.float32, -bound_hh, bound_hh)

    # hidden=None -> zeros, exactly like the PyTorch module's default.
    out, h_final = rnn_layer_pallas(x, None, w_ih, b_ih, w_hh, b_hh)
    jax.block_until_ready((out, h_final))

    out_ref, h_ref = rnn_layer_ref(x, None, w_ih, b_ih, w_hh, b_hh)
    assert out.shape == (batch, seq_len, hidden_size)
    assert h_final.shape == (batch, hidden_size)
    assert jnp.allclose(out, out_ref, atol=1e-5, rtol=1e-5)
    assert jnp.allclose(h_final, h_ref, atol=1e-5, rtol=1e-5)

    # bf16-weight fast path (f32 accumulation, f32 hidden/tanh): looser numeric check.
    out_bf, h_bf = rnn_layer_pallas(x, None, w_ih, b_ih, w_hh, b_hh,
                                    weights_dtype=jnp.bfloat16)
    jax.block_until_ready((out_bf, h_bf))
    assert jnp.allclose(out_bf, out_ref, atol=1e-1, rtol=1e-1)

    print("KERNEL_OK")
</pallas_src>

<mosaic_0001>
module attributes {stable_mosaic.version = 11 : i64} {
  func.func @_rnn_kernel(%arg0: i32, %arg1: i32, %arg2: memref<8x2x16xf32, #tpu.memory_space<vmem>>, %arg3: memref<2x128xf32, #tpu.memory_space<vmem>>, %arg4: memref<16x128xf32, #tpu.memory_space<vmem>>, %arg5: memref<128x128xf32, #tpu.memory_space<vmem>>, %arg6: memref<1x128xf32, #tpu.memory_space<vmem>>, %arg7: memref<8x2x128xf32, #tpu.memory_space<vmem>>, %arg8: memref<2x128xf32, #tpu.memory_space<vmem>>, %arg9: memref<8x2x128xf32, #tpu.memory_space<vmem>>) attributes {dimension_semantics = [#tpu.dimension_semantics<parallel>, #tpu.dimension_semantics<arbitrary>], iteration_bounds = array<i64: 1, 1>, scalar_prefetch = 0 : i64, scratch_operands = 2 : i64, tpu.core_type = #tpu.core_type<tc>, window_params = [{transform_indices = @transform_0, window_bounds = array<i64: 8, 2, 16>}, {transform_indices = @transform_1, window_bounds = array<i64: 2, 128>}, {pipeline_mode = #tpu.pipeline_mode<synchronous>, transform_indices = @transform_2, window_bounds = array<i64: 16, 128>}, {pipeline_mode = #tpu.pipeline_mode<synchronous>, transform_indices = @transform_3, window_bounds = array<i64: 128, 128>}, {pipeline_mode = #tpu.pipeline_mode<synchronous>, transform_indices = @transform_4, window_bounds = array<i64: 1, 128>}, {transform_indices = @transform_5, window_bounds = array<i64: 8, 2, 128>}]} {
    %c0_i32 = arith.constant 0 : i32
    %0 = arith.cmpi eq, %arg1, %c0_i32 : i32
    %1 = arith.extui %0 : i1 to i32
    %c0_i32_0 = arith.constant 0 : i32
    %2 = arith.cmpi ne, %1, %c0_i32_0 : i32
    scf.if %2 {
      %c0_71 = arith.constant 0 : index
      %c0_72 = arith.constant 0 : index
      %102 = vector.load %arg3[%c0_71, %c0_72] : memref<2x128xf32, #tpu.memory_space<vmem>>, vector<2x128xf32>
      %c0_73 = arith.constant 0 : index
      %c0_74 = arith.constant 0 : index
      %103 = vector.load %arg8[%c0_73, %c0_74] : memref<2x128xf32, #tpu.memory_space<vmem>>, vector<2x128xf32>
      tpu.vector_store %arg8[%c0_73, %c0_74], %102 {strides = array<i32>} : memref<2x128xf32, #tpu.memory_space<vmem>>, vector<2x128xf32>,
    } else {
    }
    %c0 = arith.constant 0 : index
    %c0_1 = arith.constant 0 : index
    %c0_2 = arith.constant 0 : index
    %3 = vector.load %arg2[%c0, %c0_1, %c0_2] : memref<8x2x16xf32, #tpu.memory_space<vmem>>, vector<8x2x16xf32>
    %4 = vector.shape_cast %3 : vector<8x2x16xf32> to vector<16x16xf32>
    %c0_3 = arith.constant 0 : index
    %c0_4 = arith.constant 0 : index
    %5 = vector.load %arg4[%c0_3, %c0_4] : memref<16x128xf32, #tpu.memory_space<vmem>>, vector<16x128xf32>
    %cst = arith.constant dense<0.000000e+00> : vector<16x128xf32>
    %6 = tpu.matmul %4, %5, %cst {dimension_numbers = #tpu.dot_dimension_numbers<[1], [0], [0], [1], [0, 0, 1, 1], [], []>} : vector<16x16xf32>, vector<16x128xf32>, vector<16x128xf32> -> vector<16x128xf32>
    %c0_5 = arith.constant 0 : index
    %c0_6 = arith.constant 0 : index
    %7 = vector.load %arg6[%c0_5, %c0_6] : memref<1x128xf32, #tpu.memory_space<vmem>>, vector<1x128xf32>
    %8 = vector.broadcast %7 : vector<1x128xf32> to vector<16x128xf32>
    %9 = arith.addf %6, %8 : vector<16x128xf32>
    %10 = vector.shape_cast %9 : vector<16x128xf32> to vector<8x2x128xf32>
    %c0_7 = arith.constant 0 : index
    %c0_8 = arith.constant 0 : index
    %c0_9 = arith.constant 0 : index
    %11 = vector.load %arg9[%c0_7, %c0_8, %c0_9] : memref<8x2x128xf32, #tpu.memory_space<vmem>>, vector<8x2x128xf32>
    tpu.vector_store %arg9[%c0_7, %c0_8, %c0_9], %10 {strides = array<i32>} : memref<8x2x128xf32, #tpu.memory_space<vmem>>, vector<8x2x128xf32>,
    %c0_10 = arith.constant 0 : index
    %c0_11 = arith.constant 0 : index
    %12 = vector.load %arg8[%c0_10, %c0_11] : memref<2x128xf32, #tpu.memory_space<vmem>>, vector<2x128xf32>
    %c0_i32_12 = arith.constant 0 : i32
    %c0_13 = arith.constant 0 : index
    %c0_14 = arith.constant 0 : index
    %13 = vector.load %arg5[%c0_13, %c0_14] : memref<128x128xf32, #tpu.memory_space<vmem>>, vector<128x128xf32>
    %cst_15 = arith.constant dense<0.000000e+00> : vector<2x128xf32>
    %14 = tpu.matmul %12, %13, %cst_15 {dimension_numbers = #tpu.dot_dimension_numbers<[1], [0], [0], [1], [0, 0, 1, 1], [], []>} : vector<2x128xf32>, vector<128x128xf32>, vector<2x128xf32> -> vector<2x128xf32>
    %15 = arith.index_cast %c0_i32_12 : i32 to index
    %c0_16 = arith.constant 0 : index
    %c0_17 = arith.constant 0 : index
    %16 = vector.load %arg9[%15, %c0_16, %c0_17] : memref<8x2x128xf32, #tpu.memory_space<vmem>>, vector<1x2x128xf32>
    %17 = vector.shape_cast %16 : vector<1x2x128xf32> to vector<2x128xf32>
    %18 = arith.addf %17, %14 : vector<2x128xf32>
    %19 = math.tanh %18 : vector<2x128xf32>
    %20 = arith.index_cast %c0_i32_12 : i32 to index
    %c0_18 = arith.constant 0 : index
    %c0_19 = arith.constant 0 : index
    %21 = vector.load %arg7[%20, %c0_18, %c0_19] : memref<8x2x128xf32, #tpu.memory_space<vmem>>, vector<1x2x128xf32>
    %22 = vector.shape_cast %21 : vector<1x2x128xf32> to vector<2x128xf32>
    %23 = vector.shape_cast %19 : vector<2x128xf32> to vector<1x2x128xf32>
    tpu.vector_store %arg7[%20, %c0_18, %c0_19], %23 {strides = array<i32>} : memref<8x2x128xf32, #tpu.memory_space<vmem>>, vector<1x2x128xf32>,
    %c1_i32 = arith.constant 1 : i32
    %c0_20 = arith.constant 0 : index
    %c0_21 = arith.constant 0 : index
    %24 = vector.load %arg5[%c0_20, %c0_21] : memref<128x128xf32, #tpu.memory_space<vmem>>, vector<128x128xf32>
    %cst_22 = arith.constant dense<0.000000e+00> : vector<2x128xf32>
    %25 = tpu.matmul %19, %24, %cst_22 {dimension_numbers = #tpu.dot_dimension_numbers<[1], [0], [0], [1], [0, 0, 1, 1], [], []>} : vector<2x128xf32>, vector<128x128xf32>, vector<2x128xf32> -> vector<2x128xf32>
    %26 = arith.index_cast %c1_i32 : i32 to index
    %c0_23 = arith.constant 0 : index
    %c0_24 = arith.constant 0 : index
    %27 = vector.load %arg9[%26, %c0_23, %c0_24] : memref<8x2x128xf32, #tpu.memory_space<vmem>>, vector<1x2x128xf32>
    %28 = vector.shape_cast %27 : vector<1x2x128xf32> to vector<2x128xf32>
    %29 = arith.addf %28, %25 : vector<2x128xf32>
    %30 = math.tanh %29 : vector<2x128xf32>
    %31 = arith.index_cast %c1_i32 : i32 to index
    %c0_25 = arith.constant 0 : index
    %c0_26 = arith.constant 0 : index
    %32 = vector.load %arg7[%31, %c0_25, %c0_26] : memref<8x2x128xf32, #tpu.memory_space<vmem>>, vector<1x2x128xf32>
    %33 = vector.shape_cast %32 : vector<1x2x128xf32> to vector<2x128xf32>
    %34 = vector.shape_cast %30 : vector<2x128xf32> to vector<1x2x128xf32>
    tpu.vector_store %arg7[%31, %c0_25, %c0_26], %34 {strides = array<i32>} : memref<8x2x128xf32, #tpu.memory_space<vmem>>, vector<1x2x128xf32>,
    %c2_i32 = arith.constant 2 : i32
    %c0_27 = arith.constant 0 : index
    %c0_28 = arith.constant 0 : index
    %35 = vector.load %arg5[%c0_27, %c0_28] : memref<128x128xf32, #tpu.memory_space<vmem>>, vector<128x128xf32>
    %cst_29 = arith.constant dense<0.000000e+00> : vector<2x128xf32>
    %36 = tpu.matmul %30, %35, %cst_29 {dimension_numbers = #tpu.dot_dimension_numbers<[1], [0], [0], [1], [0, 0, 1, 1], [], []>} : vector<2x128xf32>, vector<128x128xf32>, vector<2x128xf32> -> vector<2x128xf32>
    %37 = arith.index_cast %c2_i32 : i32 to index
    %c0_30 = arith.constant 0 : index
    %c0_31 = arith.constant 0 : index
    %38 = vector.load %arg9[%37, %c0_30, %c0_31] : memref<8x2x128xf32, #tpu.memory_space<vmem>>, vector<1x2x128xf32>
    %39 = vector.shape_cast %38 : vector<1x2x128xf32> to vector<2x128xf32>
    %40 = arith.addf %39, %36 : vector<2x128xf32>
    %41 = math.tanh %40 : vector<2x128xf32>
    %42 = arith.index_cast %c2_i32 : i32 to index
    %c0_32 = arith.constant 0 : index
    %c0_33 = arith.constant 0 : index
    %43 = vector.load %arg7[%42, %c0_32, %c0_33] : memref<8x2x128xf32, #tpu.memory_space<vmem>>, vector<1x2x128xf32>
    %44 = vector.shape_cast %43 : vector<1x2x128xf32> to vector<2x128xf32>
    %45 = vector.shape_cast %41 : vector<2x128xf32> to vector<1x2x128xf32>
    tpu.vector_store %arg7[%42, %c0_32, %c0_33], %45 {strides = array<i32>} : memref<8x2x128xf32, #tpu.memory_space<vmem>>, vector<1x2x128xf32>,
    %c3_i32 = arith.constant 3 : i32
    %c0_34 = arith.constant 0 : index
    %c0_35 = arith.constant 0 : index
    %46 = vector.load %arg5[%c0_34, %c0_35] : memref<128x128xf32, #tpu.memory_space<vmem>>, vector<128x128xf32>
    %cst_36 = arith.constant dense<0.000000e+00> : vector<2x128xf32>
    %47 = tpu.matmul %41, %46, %cst_36 {dimension_numbers = #tpu.dot_dimension_numbers<[1], [0], [0], [1], [0, 0, 1, 1], [], []>} : vector<2x128xf32>, vector<128x128xf32>, vector<2x128xf32> -> vector<2x128xf32>
    %48 = arith.index_cast %c3_i32 : i32 to index
    %c0_37 = arith.constant 0 : index
    %c0_38 = arith.constant 0 : index
    %49 = vector.load %arg9[%48, %c0_37, %c0_38] : memref<8x2x128xf32, #tpu.memory_space<vmem>>, vector<1x2x128xf32>
    %50 = vector.shape_cast %49 : vector<1x2x128xf32> to vector<2x128xf32>
    %51 = arith.addf %50, %47 : vector<2x128xf32>
    %52 = math.tanh %51 : vector<2x128xf32>
    %53 = arith.index_cast %c3_i32 : i32 to index
    %c0_39 = arith.constant 0 : index
    %c0_40 = arith.constant 0 : index
    %54 = vector.load %arg7[%53, %c0_39, %c0_40] : memref<8x2x128xf32, #tpu.memory_space<vmem>>, vector<1x2x128xf32>
    %55 = vector.shape_cast %54 : vector<1x2x128xf32> to vector<2x128xf32>
    %56 = vector.shape_cast %52 : vector<2x128xf32> to vector<1x2x128xf32>
    tpu.vector_store %arg7[%53, %c0_39, %c0_40], %56 {strides = array<i32>} : memref<8x2x128xf32, #tpu.memory_space<vmem>>, vector<1x2x128xf32>,
    %c4_i32 = arith.constant 4 : i32
    %c0_41 = arith.constant 0 : index
    %c0_42 = arith.constant 0 : index
    %57 = vector.load %arg5[%c0_41, %c0_42] : memref<128x128xf32, #tpu.memory_space<vmem>>, vector<128x128xf32>
    %cst_43 = arith.constant dense<0.000000e+00> : vector<2x128xf32>
    %58 = tpu.matmul %52, %57, %cst_43 {dimension_numbers = #tpu.dot_dimension_numbers<[1], [0], [0], [1], [0, 0, 1, 1], [], []>} : vector<2x128xf32>, vector<128x128xf32>, vector<2x128xf32> -> vector<2x128xf32>
    %59 = arith.index_cast %c4_i32 : i32 to index
    %c0_44 = arith.constant 0 : index
    %c0_45 = arith.constant 0 : index
    %60 = vector.load %arg9[%59, %c0_44, %c0_45] : memref<8x2x128xf32, #tpu.memory_space<vmem>>, vector<1x2x128xf32>
    %61 = vector.shape_cast %60 : vector<1x2x128xf32> to vector<2x128xf32>
    %62 = arith.addf %61, %58 : vector<2x128xf32>
    %63 = math.tanh %62 : vector<2x128xf32>
    %64 = arith.index_cast %c4_i32 : i32 to index
    %c0_46 = arith.constant 0 : index
    %c0_47 = arith.constant 0 : index
    %65 = vector.load %arg7[%64, %c0_46, %c0_47] : memref<8x2x128xf32, #tpu.memory_space<vmem>>, vector<1x2x128xf32>
    %66 = vector.shape_cast %65 : vector<1x2x128xf32> to vector<2x128xf32>
    %67 = vector.shape_cast %63 : vector<2x128xf32> to vector<1x2x128xf32>
    tpu.vector_store %arg7[%64, %c0_46, %c0_47], %67 {strides = array<i32>} : memref<8x2x128xf32, #tpu.memory_space<vmem>>, vector<1x2x128xf32>,
    %c5_i32 = arith.constant 5 : i32
    %c0_48 = arith.constant 0 : index
    %c0_49 = arith.constant 0 : index
    %68 = vector.load %arg5[%c0_48, %c0_49] : memref<128x128xf32, #tpu.memory_space<vmem>>, vector<128x128xf32>
    %cst_50 = arith.constant dense<0.000000e+00> : vector<2x128xf32>
    %69 = tpu.matmul %63, %68, %cst_50 {dimension_numbers = #tpu.dot_dimension_numbers<[1], [0], [0], [1], [0, 0, 1, 1], [], []>} : vector<2x128xf32>, vector<128x128xf32>, vector<2x128xf32> -> vector<2x128xf32>
    %70 = arith.index_cast %c5_i32 : i32 to index
    %c0_51 = arith.constant 0 : index
    %c0_52 = arith.constant 0 : index
    %71 = vector.load %arg9[%70, %c0_51, %c0_52] : memref<8x2x128xf32, #tpu.memory_space<vmem>>, vector<1x2x128xf32>
    %72 = vector.shape_cast %71 : vector<1x2x128xf32> to vector<2x128xf32>
    %73 = arith.addf %72, %69 : vector<2x128xf32>
    %74 = math.tanh %73 : vector<2x128xf32>
    %75 = arith.index_cast %c5_i32 : i32 to index
    %c0_53 = arith.constant 0 : index
    %c0_54 = arith.constant 0 : index
    %76 = vector.load %arg7[%75, %c0_53, %c0_54] : memref<8x2x128xf32, #tpu.memory_space<vmem>>, vector<1x2x128xf32>
    %77 = vector.shape_cast %76 : vector<1x2x128xf32> to vector<2x128xf32>
    %78 = vector.shape_cast %74 : vector<2x128xf32> to vector<1x2x128xf32>
    tpu.vector_store %arg7[%75, %c0_53, %c0_54], %78 {strides = array<i32>} : memref<8x2x128xf32, #tpu.memory_space<vmem>>, vector<1x2x128xf32>,
    %c6_i32 = arith.constant 6 : i32
    %c0_55 = arith.constant 0 : index
    %c0_56 = arith.constant 0 : index
    %79 = vector.load %arg5[%c0_55, %c0_56] : memref<128x128xf32, #tpu.memory_space<vmem>>, vector<128x128xf32>
    %cst_57 = arith.constant dense<0.000000e+00> : vector<2x128xf32>
    %80 = tpu.matmul %74, %79, %cst_57 {dimension_numbers = #tpu.dot_dimension_numbers<[1], [0], [0], [1], [0, 0, 1, 1], [], []>} : vector<2x128xf32>, vector<128x128xf32>, vector<2x128xf32> -> vector<2x128xf32>
    %81 = arith.index_cast %c6_i32 : i32 to index
    %c0_58 = arith.constant 0 : index
    %c0_59 = arith.constant 0 : index
    %82 = vector.load %arg9[%81, %c0_58, %c0_59] : memref<8x2x128xf32, #tpu.memory_space<vmem>>, vector<1x2x128xf32>
    %83 = vector.shape_cast %82 : vector<1x2x128xf32> to vector<2x128xf32>
    %84 = arith.addf %83, %80 : vector<2x128xf32>
    %85 = math.tanh %84 : vector<2x128xf32>
    %86 = arith.index_cast %c6_i32 : i32 to index
    %c0_60 = arith.constant 0 : index
    %c0_61 = arith.constant 0 : index
    %87 = vector.load %arg7[%86, %c0_60, %c0_61] : memref<8x2x128xf32, #tpu.memory_space<vmem>>, vector<1x2x128xf32>
    %88 = vector.shape_cast %87 : vector<1x2x128xf32> to vector<2x128xf32>
    %89 = vector.shape_cast %85 : vector<2x128xf32> to vector<1x2x128xf32>
    tpu.vector_store %arg7[%86, %c0_60, %c0_61], %89 {strides = array<i32>} : memref<8x2x128xf32, #tpu.memory_space<vmem>>, vector<1x2x128xf32>,
    %c7_i32 = arith.constant 7 : i32
    %c0_62 = arith.constant 0 : index
    %c0_63 = arith.constant 0 : index
    %90 = vector.load %arg5[%c0_62, %c0_63] : memref<128x128xf32, #tpu.memory_space<vmem>>, vector<128x128xf32>
    %cst_64 = arith.constant dense<0.000000e+00> : vector<2x128xf32>
    %91 = tpu.matmul %85, %90, %cst_64 {dimension_numbers = #tpu.dot_dimension_numbers<[1], [0], [0], [1], [0, 0, 1, 1], [], []>} : vector<2x128xf32>, vector<128x128xf32>, vector<2x128xf32> -> vector<2x128xf32>
    %92 = arith.index_cast %c7_i32 : i32 to index
    %c0_65 = arith.constant 0 : index
    %c0_66 = arith.constant 0 : index
    %93 = vector.load %arg9[%92, %c0_65, %c0_66] : memref<8x2x128xf32, #tpu.memory_space<vmem>>, vector<1x2x128xf32>
    %94 = vector.shape_cast %93 : vector<1x2x128xf32> to vector<2x128xf32>
    %95 = arith.addf %94, %91 : vector<2x128xf32>
    %96 = math.tanh %95 : vector<2x128xf32>
    %97 = arith.index_cast %c7_i32 : i32 to index
    %c0_67 = arith.constant 0 : index
    %c0_68 = arith.constant 0 : index
    %98 = vector.load %arg7[%97, %c0_67, %c0_68] : memref<8x2x128xf32, #tpu.memory_space<vmem>>, vector<1x2x128xf32>
    %99 = vector.shape_cast %98 : vector<1x2x128xf32> to vector<2x128xf32>
    %100 = vector.shape_cast %96 : vector<2x128xf32> to vector<1x2x128xf32>
    tpu.vector_store %arg7[%97, %c0_67, %c0_68], %100 {strides = array<i32>} : memref<8x2x128xf32, #tpu.memory_space<vmem>>, vector<1x2x128xf32>,
    %c8_i32 = arith.constant 8 : i32
    %c0_69 = arith.constant 0 : index
    %c0_70 = arith.constant 0 : index
    %101 = vector.load %arg8[%c0_69, %c0_70] : memref<2x128xf32, #tpu.memory_space<vmem>>, vector<2x128xf32>
    tpu.vector_store %arg8[%c0_69, %c0_70], %96 {strides = array<i32>} : memref<2x128xf32, #tpu.memory_space<vmem>>, vector<2x128xf32>,
    return
  }
  func.func @transform_0(%arg0: i32, %arg1: i32) -> (i32, i32, i32) {
    %c0_i32 = arith.constant 0 : i32
    %c0_i32_0 = arith.constant 0 : i32
    return %arg1, %arg0, %c0_i32 : i32, i32, i32
  }
  func.func @transform_1(%arg0: i32, %arg1: i32) -> (i32, i32) {
    %c0_i32 = arith.constant 0 : i32
    %c0_i32_0 = arith.constant 0 : i32
    return %arg0, %c0_i32 : i32, i32
  }
  func.func @transform_2(%arg0: i32, %arg1: i32) -> (i32, i32) {
    %c0_i32 = arith.constant 0 : i32
    %c0_i32_0 = arith.constant 0 : i32
    %c0_i32_1 = arith.constant 0 : i32
    return %c0_i32, %c0_i32_0 : i32, i32
  }
  func.func @transform_3(%arg0: i32, %arg1: i32) -> (i32, i32) {
    %c0_i32 = arith.constant 0 : i32
    %c0_i32_0 = arith.constant 0 : i32
    %c0_i32_1 = arith.constant 0 : i32
    return %c0_i32, %c0_i32_0 : i32, i32
  }
  func.func @transform_4(%arg0: i32, %arg1: i32) -> (i32, i32) {
    %c0_i32 = arith.constant 0 : i32
    %c0_i32_0 = arith.constant 0 : i32
    %c0_i32_1 = arith.constant 0 : i32
    return %c0_i32, %c0_i32_0 : i32, i32
  }
  func.func @transform_5(%arg0: i32, %arg1: i32) -> (i32, i32, i32) {
    %c0_i32 = arith.constant 0 : i32
    %c0_i32_0 = arith.constant 0 : i32
    return %arg1, %arg0, %c0_i32 : i32, i32, i32
  }
}

module attributes {stable_mosaic.version = 11 : i64} {
  func.func @_rnn_kernel(%arg0: i32, %arg1: i32, %arg2: memref<8x2x16xf32, #tpu.memory_space<vmem>>, %arg3: memref<2x128xf32, #tpu.memory_space<vmem>>, %arg4: memref<16x128xf32, #tpu.memory_space<vmem>>, %arg5: memref<128x128xf32, #tpu.memory_space<vmem>>, %arg6: memref<1x128xf32, #tpu.memory_space<vmem>>, %arg7: memref<8x2x128xf32, #tpu.memory_space<vmem>>, %arg8: memref<2x128xf32, #tpu.memory_space<vmem>>, %arg9: memref<8x2x128xf32, #tpu.memory_space<vmem>>) attributes {dimension_semantics = [#tpu.dimension_semantics<parallel>, #tpu.dimension_semantics<arbitrary>], iteration_bounds = array<i64: 1, 1>, scalar_prefetch = 0 : i64, scratch_operands = 2 : i64, tpu.core_type = #tpu.core_type<tc>, window_params = [{transform_indices = @transform_0, window_bounds = array<i64: 8, 2, 16>}, {transform_indices = @transform_1, window_bounds = array<i64: 2, 128>}, {pipeline_mode = #tpu.pipeline_mode<synchronous>, transform_indices = @transform_2, window_bounds = array<i64: 16, 128>}, {pipeline_mode = #tpu.pipeline_mode<synchronous>, transform_indices = @transform_3, window_bounds = array<i64: 128, 128>}, {pipeline_mode = #tpu.pipeline_mode<synchronous>, transform_indices = @transform_4, window_bounds = array<i64: 1, 128>}, {transform_indices = @transform_5, window_bounds = array<i64: 8, 2, 128>}]} {
    %c0_i32 = arith.constant 0 : i32
    %0 = arith.cmpi eq, %arg1, %c0_i32 : i32
    %1 = arith.extui %0 : i1 to i32
    %c0_i32_0 = arith.constant 0 : i32
    %2 = arith.cmpi ne, %1, %c0_i32_0 : i32
    scf.if %2 {
      %c0_71 = arith.constant 0 : index
      %c0_72 = arith.constant 0 : index
      %102 = vector.load %arg3[%c0_71, %c0_72] : memref<2x128xf32, #tpu.memory_space<vmem>>, vector<2x128xf32>
      %c0_73 = arith.constant 0 : index
      %c0_74 = arith.constant 0 : index
      %103 = vector.load %arg8[%c0_73, %c0_74] : memref<2x128xf32, #tpu.memory_space<vmem>>, vector<2x128xf32>
      tpu.vector_store %arg8[%c0_73, %c0_74], %102 {strides = array<i32>} : memref<2x128xf32, #tpu.memory_space<vmem>>, vector<2x128xf32>,
    } else {
    }
    %c0 = arith.constant 0 : index
    %c0_1 = arith.constant 0 : index
    %c0_2 = arith.constant 0 : index
    %3 = vector.load %arg2[%c0, %c0_1, %c0_2] : memref<8x2x16xf32, #tpu.memory_space<vmem>>, vector<8x2x16xf32>
    %4 = vector.shape_cast %3 : vector<8x2x16xf32> to vector<16x16xf32>
    %c0_3 = arith.constant 0 : index
    %c0_4 = arith.constant 0 : index
    %5 = vector.load %arg4[%c0_3, %c0_4] : memref<16x128xf32, #tpu.memory_space<vmem>>, vector<16x128xf32>
    %cst = arith.constant dense<0.000000e+00> : vector<16x128xf32>
    %6 = tpu.matmul %4, %5, %cst {dimension_numbers = #tpu.dot_dimension_numbers<[1], [0], [0], [1], [0, 0, 1, 1], [], []>} : vector<16x16xf32>, vector<16x128xf32>, vector<16x128xf32> -> vector<16x128xf32>
    %c0_5 = arith.constant 0 : index
    %c0_6 = arith.constant 0 : index
    %7 = vector.load %arg6[%c0_5, %c0_6] : memref<1x128xf32, #tpu.memory_space<vmem>>, vector<1x128xf32>
    %8 = vector.broadcast %7 : vector<1x128xf32> to vector<16x128xf32>
    %9 = arith.addf %6, %8 : vector<16x128xf32>
    %10 = vector.shape_cast %9 : vector<16x128xf32> to vector<8x2x128xf32>
    %c0_7 = arith.constant 0 : index
    %c0_8 = arith.constant 0 : index
    %c0_9 = arith.constant 0 : index
    %11 = vector.load %arg9[%c0_7, %c0_8, %c0_9] : memref<8x2x128xf32, #tpu.memory_space<vmem>>, vector<8x2x128xf32>
    tpu.vector_store %arg9[%c0_7, %c0_8, %c0_9], %10 {strides = array<i32>} : memref<8x2x128xf32, #tpu.memory_space<vmem>>, vector<8x2x128xf32>,
    %c0_10 = arith.constant 0 : index
    %c0_11 = arith.constant 0 : index
    %12 = vector.load %arg8[%c0_10, %c0_11] : memref<2x128xf32, #tpu.memory_space<vmem>>, vector<2x128xf32>
    %c0_i32_12 = arith.constant 0 : i32
    %c0_13 = arith.constant 0 : index
    %c0_14 = arith.constant 0 : index
    %13 = vector.load %arg5[%c0_13, %c0_14] : memref<128x128xf32, #tpu.memory_space<vmem>>, vector<128x128xf32>
    %cst_15 = arith.constant dense<0.000000e+00> : vector<2x128xf32>
    %14 = tpu.matmul %12, %13, %cst_15 {dimension_numbers = #tpu.dot_dimension_numbers<[1], [0], [0], [1], [0, 0, 1, 1], [], []>} : vector<2x128xf32>, vector<128x128xf32>, vector<2x128xf32> -> vector<2x128xf32>
    %15 = arith.index_cast %c0_i32_12 : i32 to index
    %c0_16 = arith.constant 0 : index
    %c0_17 = arith.constant 0 : index
    %16 = vector.load %arg9[%15, %c0_16, %c0_17] : memref<8x2x128xf32, #tpu.memory_space<vmem>>, vector<1x2x128xf32>
    %17 = vector.shape_cast %16 : vector<1x2x128xf32> to vector<2x128xf32>
    %18 = arith.addf %17, %14 : vector<2x128xf32>
    %19 = math.tanh %18 : vector<2x128xf32>
    %20 = arith.index_cast %c0_i32_12 : i32 to index
    %c0_18 = arith.constant 0 : index
    %c0_19 = arith.constant 0 : index
    %21 = vector.load %arg7[%20, %c0_18, %c0_19] : memref<8x2x128xf32, #tpu.memory_space<vmem>>, vector<1x2x128xf32>
    %22 = vector.shape_cast %21 : vector<1x2x128xf32> to vector<2x128xf32>
    %23 = vector.shape_cast %19 : vector<2x128xf32> to vector<1x2x128xf32>
    tpu.vector_store %arg7[%20, %c0_18, %c0_19], %23 {strides = array<i32>} : memref<8x2x128xf32, #tpu.memory_space<vmem>>, vector<1x2x128xf32>,
    %c1_i32 = arith.constant 1 : i32
    %c0_20 = arith.constant 0 : index
    %c0_21 = arith.constant 0 : index
    %24 = vector.load %arg5[%c0_20, %c0_21] : memref<128x128xf32, #tpu.memory_space<vmem>>, vector<128x128xf32>
    %cst_22 = arith.constant dense<0.000000e+00> : vector<2x128xf32>
    %25 = tpu.matmul %19, %24, %cst_22 {dimension_numbers = #tpu.dot_dimension_numbers<[1], [0], [0], [1], [0, 0, 1, 1], [], []>} : vector<2x128xf32>, vector<128x128xf32>, vector<2x128xf32> -> vector<2x128xf32>
    %26 = arith.index_cast %c1_i32 : i32 to index
    %c0_23 = arith.constant 0 : index
    %c0_24 = arith.constant 0 : index
    %27 = vector.load %arg9[%26, %c0_23, %c0_24] : memref<8x2x128xf32, #tpu.memory_space<vmem>>, vector<1x2x128xf32>
    %28 = vector.shape_cast %27 : vector<1x2x128xf32> to vector<2x128xf32>
    %29 = arith.addf %28, %25 : vector<2x128xf32>
    %30 = math.tanh %29 : vector<2x128xf32>
    %31 = arith.index_cast %c1_i32 : i32 to index
    %c0_25 = arith.constant 0 : index
    %c0_26 = arith.constant 0 : index
    %32 = vector.load %arg7[%31, %c0_25, %c0_26] : memref<8x2x128xf32, #tpu.memory_space<vmem>>, vector<1x2x128xf32>
    %33 = vector.shape_cast %32 : vector<1x2x128xf32> to vector<2x128xf32>
    %34 = vector.shape_cast %30 : vector<2x128xf32> to vector<1x2x128xf32>
    tpu.vector_store %arg7[%31, %c0_25, %c0_26], %34 {strides = array<i32>} : memref<8x2x128xf32, #tpu.memory_space<vmem>>, vector<1x2x128xf32>,
    %c2_i32 = arith.constant 2 : i32
    %c0_27 = arith.constant 0 : index
    %c0_28 = arith.constant 0 : index
    %35 = vector.load %arg5[%c0_27, %c0_28] : memref<128x128xf32, #tpu.memory_space<vmem>>, vector<128x128xf32>
    %cst_29 = arith.constant dense<0.000000e+00> : vector<2x128xf32>
    %36 = tpu.matmul %30, %35, %cst_29 {dimension_numbers = #tpu.dot_dimension_numbers<[1], [0], [0], [1], [0, 0, 1, 1], [], []>} : vector<2x128xf32>, vector<128x128xf32>, vector<2x128xf32> -> vector<2x128xf32>
    %37 = arith.index_cast %c2_i32 : i32 to index
    %c0_30 = arith.constant 0 : index
    %c0_31 = arith.constant 0 : index
    %38 = vector.load %arg9[%37, %c0_30, %c0_31] : memref<8x2x128xf32, #tpu.memory_space<vmem>>, vector<1x2x128xf32>
    %39 = vector.shape_cast %38 : vector<1x2x128xf32> to vector<2x128xf32>
    %40 = arith.addf %39, %36 : vector<2x128xf32>
    %41 = math.tanh %40 : vector<2x128xf32>
    %42 = arith.index_cast %c2_i32 : i32 to index
    %c0_32 = arith.constant 0 : index
    %c0_33 = arith.constant 0 : index
    %43 = vector.load %arg7[%42, %c0_32, %c0_33] : memref<8x2x128xf32, #tpu.memory_space<vmem>>, vector<1x2x128xf32>
    %44 = vector.shape_cast %43 : vector<1x2x128xf32> to vector<2x128xf32>
    %45 = vector.shape_cast %41 : vector<2x128xf32> to vector<1x2x128xf32>
    tpu.vector_store %arg7[%42, %c0_32, %c0_33], %45 {strides = array<i32>} : memref<8x2x128xf32, #tpu.memory_space<vmem>>, vector<1x2x128xf32>,
    %c3_i32 = arith.constant 3 : i32
    %c0_34 = arith.constant 0 : index
    %c0_35 = arith.constant 0 : index
    %46 = vector.load %arg5[%c0_34, %c0_35] : memref<128x128xf32, #tpu.memory_space<vmem>>, vector<128x128xf32>
    %cst_36 = arith.constant dense<0.000000e+00> : vector<2x128xf32>
    %47 = tpu.matmul %41, %46, %cst_36 {dimension_numbers = #tpu.dot_dimension_numbers<[1], [0], [0], [1], [0, 0, 1, 1], [], []>} : vector<2x128xf32>, vector<128x128xf32>, vector<2x128xf32> -> vector<2x128xf32>
    %48 = arith.index_cast %c3_i32 : i32 to index
    %c0_37 = arith.constant 0 : index
    %c0_38 = arith.constant 0 : index
    %49 = vector.load %arg9[%48, %c0_37, %c0_38] : memref<8x2x128xf32, #tpu.memory_space<vmem>>, vector<1x2x128xf32>
    %50 = vector.shape_cast %49 : vector<1x2x128xf32> to vector<2x128xf32>
    %51 = arith.addf %50, %47 : vector<2x128xf32>
    %52 = math.tanh %51 : vector<2x128xf32>
    %53 = arith.index_cast %c3_i32 : i32 to index
    %c0_39 = arith.constant 0 : index
    %c0_40 = arith.constant 0 : index
    %54 = vector.load %arg7[%53, %c0_39, %c0_40] : memref<8x2x128xf32, #tpu.memory_space<vmem>>, vector<1x2x128xf32>
    %55 = vector.shape_cast %54 : vector<1x2x128xf32> to vector<2x128xf32>
    %56 = vector.shape_cast %52 : vector<2x128xf32> to vector<1x2x128xf32>
    tpu.vector_store %arg7[%53, %c0_39, %c0_40], %56 {strides = array<i32>} : memref<8x2x128xf32, #tpu.memory_space<vmem>>, vector<1x2x128xf32>,
    %c4_i32 = arith.constant 4 : i32
    %c0_41 = arith.constant 0 : index
    %c0_42 = arith.constant 0 : index
    %57 = vector.load %arg5[%c0_41, %c0_42] : memref<128x128xf32, #tpu.memory_space<vmem>>, vector<128x128xf32>
    %cst_43 = arith.constant dense<0.000000e+00> : vector<2x128xf32>
    %58 = tpu.matmul %52, %57, %cst_43 {dimension_numbers = #tpu.dot_dimension_numbers<[1], [0], [0], [1], [0, 0, 1, 1], [], []>} : vector<2x128xf32>, vector<128x128xf32>, vector<2x128xf32> -> vector<2x128xf32>
    %59 = arith.index_cast %c4_i32 : i32 to index
    %c0_44 = arith.constant 0 : index
    %c0_45 = arith.constant 0 : index
    %60 = vector.load %arg9[%59, %c0_44, %c0_45] : memref<8x2x128xf32, #tpu.memory_space<vmem>>, vector<1x2x128xf32>
    %61 = vector.shape_cast %60 : vector<1x2x128xf32> to vector<2x128xf32>
    %62 = arith.addf %61, %58 : vector<2x128xf32>
    %63 = math.tanh %62 : vector<2x128xf32>
    %64 = arith.index_cast %c4_i32 : i32 to index
    %c0_46 = arith.constant 0 : index
    %c0_47 = arith.constant 0 : index
    %65 = vector.load %arg7[%64, %c0_46, %c0_47] : memref<8x2x128xf32, #tpu.memory_space<vmem>>, vector<1x2x128xf32>
    %66 = vector.shape_cast %65 : vector<1x2x128xf32> to vector<2x128xf32>
    %67 = vector.shape_cast %63 : vector<2x128xf32> to vector<1x2x128xf32>
    tpu.vector_store %arg7[%64, %c0_46, %c0_47], %67 {strides = array<i32>} : memref<8x2x128xf32, #tpu.memory_space<vmem>>, vector<1x2x128xf32>,
    %c5_i32 = arith.constant 5 : i32
    %c0_48 = arith.constant 0 : index
    %c0_49 = arith.constant 0 : index
    %68 = vector.load %arg5[%c0_48, %c0_49] : memref<128x128xf32, #tpu.memory_space<vmem>>, vector<128x128xf32>
    %cst_50 = arith.constant dense<0.000000e+00> : vector<2x128xf32>
    %69 = tpu.matmul %63, %68, %cst_50 {dimension_numbers = #tpu.dot_dimension_numbers<[1], [0], [0], [1], [0, 0, 1, 1], [], []>} : vector<2x128xf32>, vector<128x128xf32>, vector<2x128xf32> -> vector<2x128xf32>
    %70 = arith.index_cast %c5_i32 : i32 to index
    %c0_51 = arith.constant 0 : index
    %c0_52 = arith.constant 0 : index
    %71 = vector.load %arg9[%70, %c0_51, %c0_52] : memref<8x2x128xf32, #tpu.memory_space<vmem>>, vector<1x2x128xf32>
    %72 = vector.shape_cast %71 : vector<1x2x128xf32> to vector<2x128xf32>
    %73 = arith.addf %72, %69 : vector<2x128xf32>
    %74 = math.tanh %73 : vector<2x128xf32>
    %75 = arith.index_cast %c5_i32 : i32 to index
    %c0_53 = arith.constant 0 : index
    %c0_54 = arith.constant 0 : index
    %76 = vector.load %arg7[%75, %c0_53, %c0_54] : memref<8x2x128xf32, #tpu.memory_space<vmem>>, vector<1x2x128xf32>
    %77 = vector.shape_cast %76 : vector<1x2x128xf32> to vector<2x128xf32>
    %78 = vector.shape_cast %74 : vector<2x128xf32> to vector<1x2x128xf32>
    tpu.vector_store %arg7[%75, %c0_53, %c0_54], %78 {strides = array<i32>} : memref<8x2x128xf32, #tpu.memory_space<vmem>>, vector<1x2x128xf32>,
    %c6_i32 = arith.constant 6 : i32
    %c0_55 = arith.constant 0 : index
    %c0_56 = arith.constant 0 : index
    %79 = vector.load %arg5[%c0_55, %c0_56] : memref<128x128xf32, #tpu.memory_space<vmem>>, vector<128x128xf32>
    %cst_57 = arith.constant dense<0.000000e+00> : vector<2x128xf32>
    %80 = tpu.matmul %74, %79, %cst_57 {dimension_numbers = #tpu.dot_dimension_numbers<[1], [0], [0], [1], [0, 0, 1, 1], [], []>} : vector<2x128xf32>, vector<128x128xf32>, vector<2x128xf32> -> vector<2x128xf32>
    %81 = arith.index_cast %c6_i32 : i32 to index
    %c0_58 = arith.constant 0 : index
    %c0_59 = arith.constant 0 : index
    %82 = vector.load %arg9[%81, %c0_58, %c0_59] : memref<8x2x128xf32, #tpu.memory_space<vmem>>, vector<1x2x128xf32>
    %83 = vector.shape_cast %82 : vector<1x2x128xf32> to vector<2x128xf32>
    %84 = arith.addf %83, %80 : vector<2x128xf32>
    %85 = math.tanh %84 : vector<2x128xf32>
    %86 = arith.index_cast %c6_i32 : i32 to index
    %c0_60 = arith.constant 0 : index
    %c0_61 = arith.constant 0 : index
    %87 = vector.load %arg7[%86, %c0_60, %c0_61] : memref<8x2x128xf32, #tpu.memory_space<vmem>>, vector<1x2x128xf32>
    %88 = vector.shape_cast %87 : vector<1x2x128xf32> to vector<2x128xf32>
    %89 = vector.shape_cast %85 : vector<2x128xf32> to vector<1x2x128xf32>
    tpu.vector_store %arg7[%86, %c0_60, %c0_61], %89 {strides = array<i32>} : memref<8x2x128xf32, #tpu.memory_space<vmem>>, vector<1x2x128xf32>,
    %c7_i32 = arith.constant 7 : i32
    %c0_62 = arith.constant 0 : index
    %c0_63 = arith.constant 0 : index
    %90 = vector.load %arg5[%c0_62, %c0_63] : memref<128x128xf32, #tpu.memory_space<vmem>>, vector<128x128xf32>
    %cst_64 = arith.constant dense<0.000000e+00> : vector<2x128xf32>
    %91 = tpu.matmul %85, %90, %cst_64 {dimension_numbers = #tpu.dot_dimension_numbers<[1], [0], [0], [1], [0, 0, 1, 1], [], []>} : vector<2x128xf32>, vector<128x128xf32>, vector<2x128xf32> -> vector<2x128xf32>
    %92 = arith.index_cast %c7_i32 : i32 to index
    %c0_65 = arith.constant 0 : index
    %c0_66 = arith.constant 0 : index
    %93 = vector.load %arg9[%92, %c0_65, %c0_66] : memref<8x2x128xf32, #tpu.memory_space<vmem>>, vector<1x2x128xf32>
    %94 = vector.shape_cast %93 : vector<1x2x128xf32> to vector<2x128xf32>
    %95 = arith.addf %94, %91 : vector<2x128xf32>
    %96 = math.tanh %95 : vector<2x128xf32>
    %97 = arith.index_cast %c7_i32 : i32 to index
    %c0_67 = arith.constant 0 : index
    %c0_68 = arith.constant 0 : index
    %98 = vector.load %arg7[%97, %c0_67, %c0_68] : memref<8x2x128xf32, #tpu.memory_space<vmem>>, vector<1x2x128xf32>
    %99 = vector.shape_cast %98 : vector<1x2x128xf32> to vector<2x128xf32>
    %100 = vector.shape_cast %96 : vector<2x128xf32> to vector<1x2x128xf32>
    tpu.vector_store %arg7[%97, %c0_67, %c0_68], %100 {strides = array<i32>} : memref<8x2x128xf32, #tpu.memory_space<vmem>>, vector<1x2x128xf32>,
    %c8_i32 = arith.constant 8 : i32
    %c0_69 = arith.constant 0 : index
    %c0_70 = arith.constant 0 : index
    %101 = vector.load %arg8[%c0_69, %c0_70] : memref<2x128xf32, #tpu.memory_space<vmem>>, vector<2x128xf32>
    tpu.vector_store %arg8[%c0_69, %c0_70], %96 {strides = array<i32>} : memref<2x128xf32, #tpu.memory_space<vmem>>, vector<2x128xf32>,
    return
  }
  func.func @transform_0(%arg0: i32, %arg1: i32) -> (i32, i32, i32) {
    %c0_i32 = arith.constant 0 : i32
    %c0_i32_0 = arith.constant 0 : i32
    return %arg1, %arg0, %c0_i32 : i32, i32, i32
  }
  func.func @transform_1(%arg0: i32, %arg1: i32) -> (i32, i32) {
    %c0_i32 = arith.constant 0 : i32
    %c0_i32_0 = arith.constant 0 : i32
    return %arg0, %c0_i32 : i32, i32
  }
  func.func @transform_2(%arg0: i32, %arg1: i32) -> (i32, i32) {
    %c0_i32 = arith.constant 0 : i32
    %c0_i32_0 = arith.constant 0 : i32
    %c0_i32_1 = arith.constant 0 : i32
    return %c0_i32, %c0_i32_0 : i32, i32
  }
  func.func @transform_3(%arg0: i32, %arg1: i32) -> (i32, i32) {
    %c0_i32 = arith.constant 0 : i32
    %c0_i32_0 = arith.constant 0 : i32
    %c0_i32_1 = arith.constant 0 : i32
    return %c0_i32, %c0_i32_0 : i32, i32
  }
  func.func @transform_4(%arg0: i32, %arg1: i32) -> (i32, i32) {
    %c0_i32 = arith.constant 0 : i32
    %c0_i32_0 = arith.constant 0 : i32
    %c0_i32_1 = arith.constant 0 : i32
    return %c0_i32, %c0_i32_0 : i32, i32
  }
  func.func @transform_5(%arg0: i32, %arg1: i32) -> (i32, i32, i32) {
    %c0_i32 = arith.constant 0 : i32
    %c0_i32_0 = arith.constant 0 : i32
    return %arg1, %arg0, %c0_i32 : i32, i32, i32
  }
}

</mosaic_0001>

<llo_original>
// kernel: tpu_custom_call.1
$region0: #{tpu_custom_call.1}
  #allocation0 [shape = 'u32[]', space=smem, size = 0x4, offset = 0x4, fixed_abs, tag = 'smem constant byte address 0x4 - core index']
  #allocation1 [shape = 'u32[72,128]{1,0:T(1,128)}', space=vmem, size = 0x9000, scoped, tag = 'internal scratch']
  #allocation2 [shape = 'f32[2,128]{1,0:T(2,128)}', space=vmem, size = 0x400, scoped, tag = 'scratch operand']
  #allocation3 [shape = 'f32[8,2,128]{2,1,0:T(2,128)}', space=vmem, size = 0x2000, scoped, tag = 'scratch operand']
  %s0 = inlined_call_operand.hbm [shape: f32[8,2,16], index: 0, kind: input, shape index: {}]
  %s1 = inlined_call_operand.hbm [shape: f32[2,128], index: 1, kind: input, shape index: {}]
  %s2 = inlined_call_operand.hbm [shape: f32[16,128], index: 2, kind: input, shape index: {}]
  %s3 = inlined_call_operand.hbm [shape: f32[128,128], index: 3, kind: input, shape index: {}]
  %s4 = inlined_call_operand.vmem [shape: f32[1,128], index: 4, kind: input, shape index: {}]
  %s5 = inlined_call_operand.hbm [shape: f32[8,2,128], index: 5, kind: output, shape index: {}]
  %s6 = sld [smem:[#allocation0]]
  $region50: #{tpu_custom_call.1} parent=0
    _
  %s8 = ssub.s32 1, %s6
  %s9 = scalar_select 0, %s8, %s6
  $region1: #{tpu_custom_call.1} parent=0
    #allocation4 [shape = 'u8[8192]{0}', space=vmem, size = 0x2000, scoped, tag = 'input window, operand 0, single buffered']
    #allocation5 [shape = 's32[1]{0}', space=sflag, size = 0x4, scoped, tag = 'scoped memory for tpu_custom_call.1']
    #allocation6 [shape = 's32[1]{0}', space=sflag, size = 0x4, scoped, tag = 'scoped memory for tpu_custom_call.1']
    #allocation7 [shape = 'u8[1024]{0}', space=vmem, size = 0x400, scoped, tag = 'input window, operand 1, single buffered']
    #allocation8 [shape = 's32[1]{0}', space=sflag, size = 0x4, scoped, tag = 'scoped memory for tpu_custom_call.1']
    #allocation9 [shape = 'u8[8192]{0}', space=vmem, size = 0x2000, scoped, tag = 'input window, operand 2, single buffered']
    #allocation10 [shape = 'u8[65536]{0}', space=vmem, size = 0x10000, scoped, tag = 'input window, operand 3, single buffered']
    #allocation11 [shape = 's32[1]{0}', space=sflag, size = 0x4, scoped, tag = 'scoped memory for tpu_custom_call.1']
    #allocation12 [shape = 'u8[8192]{0}', space=vmem, size = 0x2000, scoped, tag = 'output window, operand 0, single buffered']
    %10 = vsyncpa [#allocation5], 0
    %11 = vsyncpa [#allocation8], 0
    %12 = vsyncpa [#allocation11], 0
    %13 = vsyncpa [#allocation6], 0
    // Predicated region
    $region2: #{tpu_custom_call.1} parent=1 // pred_check
      _
    $region3: #{tpu_custom_call.1} parent=1 // pred_check_branch
      %15 = sbr.rel (0) target = $region5
    $region4: #{tpu_custom_call.1} parent=1 // pred_region
      %17 = vsyncadd [#allocation5], 0
      %s18 = sshll.u32 %s0, 4
      %s19 = int_to_ptr.hbm [resolvable:$true] %s18
      %s20 = sshll.u32 [#allocation4], 4
      %s21 = int_to_ptr.vmem [resolvable:$true] %s20
      %26 = dma.hbm_to_vmem [thread:$0]  %s19, 256, %s21, [#allocation5], 32, 32, 2
    $region5: #{tpu_custom_call.1} parent=1 // pred_fallthru
      _
    // Predicated region
    $region6: #{tpu_custom_call.1} parent=1 // pred_check
      _
    $region7: #{tpu_custom_call.1} parent=1 // pred_check_branch
      %28 = sbr.rel (0) target = $region9
    $region8: #{tpu_custom_call.1} parent=1 // pred_region
      %30 = vsyncadd [#allocation8], 0
      %s32 = sshll.u32 %s1, 4
      %s33 = int_to_ptr.hbm [resolvable:$true] %s32
      %s34 = sshll.u32 [#allocation7], 4
      %s35 = int_to_ptr.vmem [resolvable:$true] %s34
      %37 = dma.hbm_to_vmem [thread:$0]  %s33, 32, %s35, [#allocation8]
    $region9: #{tpu_custom_call.1} parent=1 // pred_fallthru
      _
    // Predicated region
    $region10: #{tpu_custom_call.1} parent=1 // pred_check
      _
    $region11: #{tpu_custom_call.1} parent=1 // pred_check_branch
      %39 = sbr.rel (0) target = $region13
    $region12: #{tpu_custom_call.1} parent=1 // pred_region
      %41 = vsyncadd [#allocation8], 0
      %s42 = sshll.u32 %s2, 4
      %s43 = int_to_ptr.hbm [resolvable:$true] %s42
      %s44 = sshll.u32 [#allocation9], 4
      %s45 = int_to_ptr.vmem [resolvable:$true] %s44
      %50 = dma.hbm_to_vmem [thread:$0]  %s43, 256, %s45, [#allocation8], 128, 128, 8
    $region13: #{tpu_custom_call.1} parent=1 // pred_fallthru
      _
    // Predicated region
    $region14: #{tpu_custom_call.1} parent=1 // pred_check
      _
    $region15: #{tpu_custom_call.1} parent=1 // pred_check_branch
      %52 = sbr.rel (0) target = $region17
    $region16: #{tpu_custom_call.1} parent=1 // pred_region
      %54 = vsyncadd [#allocation11], 0
      %s55 = sshll.u32 %s3, 4
      %s56 = int_to_ptr.hbm [resolvable:$true] %s55
      %s57 = sshll.u32 [#allocation10], 4
      %s58 = int_to_ptr.vmem [resolvable:$true] %s57
      %63 = dma.hbm_to_vmem [thread:$0]  %s56, 2048, %s58, [#allocation11], 128, 128, 8
    $region17: #{tpu_custom_call.1} parent=1 // pred_fallthru
      _
    // Predicated region
    $region18: #{tpu_custom_call.1} parent=1 // pred_check
      _
    $region19: #{tpu_custom_call.1} parent=1 // pred_check_branch
      %65 = sbr.rel (0) target = $region21
    $region20: #{tpu_custom_call.1} parent=1 // pred_region
      _
    $region21: #{tpu_custom_call.1} parent=1 // pred_fallthru
      _
    // Predicated region
    $region22: #{tpu_custom_call.1} parent=1 // pred_check
      _
    $region23: #{tpu_custom_call.1} parent=1 // pred_check_branch
      %67 = sbr.rel (0) target = $region25
    $region24: #{tpu_custom_call.1} parent=1 // pred_region
      %69 = dma.done [#allocation5], 256
    $region25: #{tpu_custom_call.1} parent=1 // pred_fallthru
      _
    // Predicated region
    $region26: #{tpu_custom_call.1} parent=1 // pred_check
      _
    $region27: #{tpu_custom_call.1} parent=1 // pred_check_branch
      %71 = sbr.rel (0) target = $region29
    $region28: #{tpu_custom_call.1} parent=1 // pred_region
      %73 = dma.done [#allocation8], 32
    $region29: #{tpu_custom_call.1} parent=1 // pred_fallthru
      _
    // Predicated region
    $region30: #{tpu_custom_call.1} parent=1 // pred_check
      _
    $region31: #{tpu_custom_call.1} parent=1 // pred_check_branch
      %75 = sbr.rel (0) target = $region33
    $region32: #{tpu_custom_call.1} parent=1 // pred_region
      %77 = dma.done [#allocation8], 256
    $region33: #{tpu_custom_call.1} parent=1 // pred_fallthru
      _
    // Predicated region
    $region34: #{tpu_custom_call.1} parent=1 // pred_check
      _
    $region35: #{tpu_custom_call.1} parent=1 // pred_check_branch
      %79 = sbr.rel (0) target = $region37
    $region36: #{tpu_custom_call.1} parent=1 // pred_region
      %81 = dma.done [#allocation11], 2048
    $region37: #{tpu_custom_call.1} parent=1 // pred_fallthru
      _
    %p82 = scmp.eq.s32.totalorder 0, 0
    // Predicated region
    $region38: #{tpu_custom_call.1} parent=1 // pred_check
      %p83 = pneg %p82
    $region39: #{tpu_custom_call.1} parent=1 // pred_check_branch
      %85 = sbr.rel (%p83) target = $region41
    $region40: #{tpu_custom_call.1} parent=1 // pred_region
      %v86 = vld [vmem:[#allocation7] sm:$0x3]
      %87 = vst [vmem:[#allocation2] sm:$0x3] %v86
    $region41: #{tpu_custom_call.1} parent=1 // pred_fallthru
      _
    %v88 = vld [vmem:[#allocation4] sm:$0x3]
    %v89 = vld [vmem:[#allocation4 + $0x2] sm:$0x3]
    %v90 = vld [vmem:[#allocation4 + $0x4] sm:$0x3]
    %v91 = vld [vmem:[#allocation4 + $0x6] sm:$0x3]
    %v92 = vld [vmem:[#allocation4 + $0x8] sm:$0x3]
    %v93 = vld [vmem:[#allocation4 + $0xa] sm:$0x3]
    %v94 = vld [vmem:[#allocation4 + $0xc] sm:$0x3]
    %v95 = vld [vmem:[#allocation4 + $0xe] sm:$0x3]
    %v96 = vld [vmem:[#allocation9] sm:$0xff]
    %v97 = vld [vmem:[#allocation9 + $0x8] sm:$0xff]
    %v98 = vld [vmem:[%s4] sm:$0x1]
    %v100 = vperm.slane %v98, 0
    %110 = vst [vmem:[#allocation1] ss:$4 sm:$0xff] %v88
    %s111 = scalar_lea.vmem [#allocation1], 1
    %112 = vst [vmem:[%s111] ss:$4 sm:$0xff] %v89
    %s113 = scalar_lea.vmem [#allocation1], 2
    %114 = vst [vmem:[%s113] ss:$4 sm:$0xff] %v90
    %s115 = scalar_lea.vmem [#allocation1], 3
    %116 = vst [vmem:[%s115] ss:$4 sm:$0xff] %v91
    %s117 = scalar_lea.vmem [#allocation1], 32
    %118 = vst [vmem:[%s117] ss:$4 sm:$0xff] %v92
    %s119 = scalar_lea.vmem [#allocation1], 33
    %120 = vst [vmem:[%s119] ss:$4 sm:$0xff] %v93
    %s121 = scalar_lea.vmem [#allocation1], 34
    %122 = vst [vmem:[%s121] ss:$4 sm:$0xff] %v94
    %s123 = scalar_lea.vmem [#allocation1], 35
    %124 = vst [vmem:[%s123] ss:$4 sm:$0xff] %v95
    %v125 = vld.sshfl [vmem:[#allocation1] sm:$0xff pattern:$0x73625140]
    %v126 = vld.sshfl [vmem:[#allocation1 + $0x20] sm:$0xff pattern:$0x73625140]
    %vm127 = vcmask 130048
    %v128 = vsel %vm127, %v125, 0
    %v130 = vsel %vm127, %v126, 0
    %132 = vmatpush.msra.mxu0 0.0
    %133 = vmatpush.msra.mxu0 0.0
    %134 = vmatpush.msra.mxu0 0.0
    %135 = vmatpush.msra.mxu0 0.0
    %136 = vmatpush.msra.mxu0 0.0
    %137 = vmatpush.msra.mxu0 0.0
    %138 = vmatpush.msra.mxu0 0.0
    %139 = vmatpush.msra.mxu0 0.0
    %140 = vmatpush.msra.mxu0 0.0
    %141 = vmatpush.msra.mxu0 0.0
    %142 = vmatpush.msra.mxu0 0.0
    %143 = vmatpush.msra.mxu0 0.0
    %144 = vmatpush.msra.mxu0 0.0
    %145 = vmatpush.msra.mxu0 0.0
    %146 = vmatpush.msra.mxu0 %v97
    %147 = vmatpush.msra.mxu0 %v96
    %148 = vmatmul.f32.gmra.mxu0 %v128
    %v149 = vpop.f32.mrf.mxu0
    %v150 = vadd.f32 %v100, %v149
    %151 = vmatmul.f32.gmra.mxu0 %v130
    %v152 = vpop.f32.mrf.mxu0
    %v153 = vadd.f32 %v100, %v152
    %154 = vdwg.mxu0
    %v157 = vrot.slane %v150, 2
    %v158 = vrot.slane %v150, 4
    %v159 = vrot.slane %v150, 6
    %v160 = vrot.slane %v153, 2
    %v161 = vrot.slane %v153, 4
    %v162 = vrot.slane %v153, 6
    %169 = vst [vmem:[#allocation3] sm:$0x3] %v150
    %170 = vst [vmem:[#allocation3 + $0x2] sm:$0x3] %v157
    %171 = vst [vmem:[#allocation3 + $0x4] sm:$0x3] %v158
    %172 = vst [vmem:[#allocation3 + $0x6] sm:$0x3] %v159
    %173 = vst [vmem:[#allocation3 + $0x8] sm:$0x3] %v153
    %174 = vst [vmem:[#allocation3 + $0xa] sm:$0x3] %v160
    %175 = vst [vmem:[#allocation3 + $0xc] sm:$0x3] %v161
    %176 = vst [vmem:[#allocation3 + $0xe] sm:$0x3] %v162
    %v177 = vld [vmem:[#allocation2] sm:$0x3]
    %v178 = vld [vmem:[#allocation10] sm:$0xff]
    %v179 = vld [vmem:[#allocation10 + $0x8] sm:$0xff]
    %v180 = vld [vmem:[#allocation10 + $0x10] sm:$0xff]
    %v181 = vld [vmem:[#allocation10 + $0x18] sm:$0xff]
    %v182 = vld [vmem:[#allocation10 + $0x20] sm:$0xff]
    %v183 = vld [vmem:[#allocation10 + $0x28] sm:$0xff]
    %v184 = vld [vmem:[#allocation10 + $0x30] sm:$0xff]
    %v185 = vld [vmem:[#allocation10 + $0x38] sm:$0xff]
    %v186 = vld [vmem:[#allocation10 + $0x40] sm:$0xff]
    %v187 = vld [vmem:[#allocation10 + $0x48] sm:$0xff]
    %v188 = vld [vmem:[#allocation10 + $0x50] sm:$0xff]
    %v189 = vld [vmem:[#allocation10 + $0x58] sm:$0xff]
    %v190 = vld [vmem:[#allocation10 + $0x60] sm:$0xff]
    %v191 = vld [vmem:[#allocation10 + $0x68] sm:$0xff]
    %v192 = vld [vmem:[#allocation10 + $0x70] sm:$0xff]
    %v193 = vld [vmem:[#allocation10 + $0x78] sm:$0xff]
    %194 = vmatpush.msra.mxu0 %v193
    %195 = vmatpush.msra.mxu0 %v192
    %196 = vmatpush.msra.mxu0 %v191
    %197 = vmatpush.msra.mxu0 %v190
    %198 = vmatpush.msra.mxu0 %v189
    %199 = vmatpush.msra.mxu0 %v188
    %200 = vmatpush.msra.mxu0 %v187
    %201 = vmatpush.msra.mxu0 %v186
    %202 = vmatpush.msra.mxu0 %v185
    %203 = vmatpush.msra.mxu0 %v184
    %204 = vmatpush.msra.mxu0 %v183
    %205 = vmatpush.msra.mxu0 %v182
    %206 = vmatpush.msra.mxu0 %v181
    %207 = vmatpush.msra.mxu0 %v180
    %208 = vmatpush.msra.mxu0 %v179
    %209 = vmatpush.msra.mxu0 %v178
    %210 = vmatmul.f32.gmra.mxu0 %v177
    %v211 = vpop.f32.mrf.mxu0
    %v212 = vadd.f32 0.0, %v211
    %213 = vdwg.mxu0
    %v214 = vld [vmem:[#allocation3] sm:$0x3]
    %v215 = vadd.f32 %v214, %v212
    %v216 = vtanh.pop %v215
    %217 = vst [vmem:[#allocation12] sm:$0x3] %v216
    %v218 = vld [vmem:[#allocation10] sm:$0xff]
    %v219 = vld [vmem:[#allocation10 + $0x8] sm:$0xff]
    %v220 = vld [vmem:[#allocation10 + $0x10] sm:$0xff]
    %v221 = vld [vmem:[#allocation10 + $0x18] sm:$0xff]
    %v222 = vld [vmem:[#allocation10 + $0x20] sm:$0xff]
    %v223 = vld [vmem:[#allocation10 + $0x28] sm:$0xff]
    %v224 = vld [vmem:[#allocation10 + $0x30] sm:$0xff]
    %v225 = vld [vmem:[#allocation10 + $0x38] sm:$0xff]
    %v226 = vld [vmem:[#allocation10 + $0x40] sm:$0xff]
    %v227 = vld [vmem:[#allocation10 + $0x48] sm:$0xff]
    %v228 = vld [vmem:[#allocation10 + $0x50] sm:$0xff]
    %v229 = vld [vmem:[#allocation10 + $0x58] sm:$0xff]
    %v230 = vld [vmem:[#allocation10 + $0x60] sm:$0xff]
    %v231 = vld [vmem:[#allocation10 + $0x68] sm:$0xff]
    %v232 = vld [vmem:[#allocation10 + $0x70] sm:$0xff]
    %v233 = vld [vmem:[#allocation10 + $0x78] sm:$0xff]
    %234 = vmatpush.msra.mxu0 %v233
    %235 = vmatpush.msra.mxu0 %v232
    %236 = vmatpush.msra.mxu0 %v231
    %237 = vmatpush.msra.mxu0 %v230
    %238 = vmatpush.msra.mxu0 %v229
    %239 = vmatpush.msra.mxu0 %v228
    %240 = vmatpush.msra.mxu0 %v227
    %241 = vmatpush.msra.mxu0 %v226
    %242 = vmatpush.msra.mxu0 %v225
    %243 = vmatpush.msra.mxu0 %v224
    %244 = vmatpush.msra.mxu0 %v223
    %245 = vmatpush.msra.mxu0 %v222
    %246 = vmatpush.msra.mxu0 %v221
    %247 = vmatpush.msra.mxu0 %v220
    %248 = vmatpush.msra.mxu0 %v219
    %249 = vmatpush.msra.mxu0 %v218
    %250 = vmatmul.f32.gmra.mxu0 %v216
    %v251 = vpop.f32.mrf.mxu0
    %v252 = vadd.f32 0.0, %v251
    %253 = vdwg.mxu0
    %s254 = scalar_lea.vmem [#allocation3], 2
    %v255 = vld [vmem:[%s254] sm:$0x3]
    %v256 = vadd.f32 %v255, %v252
    %v257 = vtanh.pop %v256
    %s258 = scalar_lea.vmem [#allocation12], 2
    %259 = vst [vmem:[%s258] sm:$0x3] %v257
    %v260 = vld [vmem:[#allocation10] sm:$0xff]
    %v261 = vld [vmem:[#allocation10 + $0x8] sm:$0xff]
    %v262 = vld [vmem:[#allocation10 + $0x10] sm:$0xff]
    %v263 = vld [vmem:[#allocation10 + $0x18] sm:$0xff]
    %v264 = vld [vmem:[#allocation10 + $0x20] sm:$0xff]
    %v265 = vld [vmem:[#allocation10 + $0x28] sm:$0xff]
    %v266 = vld [vmem:[#allocation10 + $0x30] sm:$0xff]
    %v267 = vld [vmem:[#allocation10 + $0x38] sm:$0xff]
    %v268 = vld [vmem:[#allocation10 + $0x40] sm:$0xff]
    %v269 = vld [vmem:[#allocation10 + $0x48] sm:$0xff]
    %v270 = vld [vmem:[#allocation10 + $0x50] sm:$0xff]
    %v271 = vld [vmem:[#allocation10 + $0x58] sm:$0xff]
    %v272 = vld [vmem:[#allocation10 + $0x60] sm:$0xff]
    %v273 = vld [vmem:[#allocation10 + $0x68] sm:$0xff]
    %v274 = vld [vmem:[#allocation10 + $0x70] sm:$0xff]
    %v275 = vld [vmem:[#allocation10 + $0x78] sm:$0xff]
    %276 = vmatpush.msra.mxu0 %v275
    %277 = vmatpush.msra.mxu0 %v274
    %278 = vmatpush.msra.mxu0 %v273
    %279 = vmatpush.msra.mxu0 %v272
    %280 = vmatpush.msra.mxu0 %v271
    %281 = vmatpush.msra.mxu0 %v270
    %282 = vmatpush.msra.mxu0 %v269
    %283 = vmatpush.msra.mxu0 %v268
    %284 = vmatpush.msra.mxu0 %v267
    %285 = vmatpush.msra.mxu0 %v266
    %286 = vmatpush.msra.mxu0 %v265
    %287 = vmatpush.msra.mxu0 %v264
    %288 = vmatpush.msra.mxu0 %v263
    %289 = vmatpush.msra.mxu0 %v262
    %290 = vmatpush.msra.mxu0 %v261
    %291 = vmatpush.msra.mxu0 %v260
    %292 = vmatmul.f32.gmra.mxu0 %v257
    %v293 = vpop.f32.mrf.mxu0
    %v294 = vadd.f32 0.0, %v293
    %295 = vdwg.mxu0
    %s296 = scalar_lea.vmem [#allocation3], 4
    %v297 = vld [vmem:[%s296] sm:$0x3]
    %v298 = vadd.f32 %v297, %v294
    %v299 = vtanh.pop %v298
    %s300 = scalar_lea.vmem [#allocation12], 4
    %301 = vst [vmem:[%s300] sm:$0x3] %v299
    %v302 = vld [vmem:[#allocation10] sm:$0xff]
    %v303 = vld [vmem:[#allocation10 + $0x8] sm:$0xff]
    %v304 = vld [vmem:[#allocation10 + $0x10] sm:$0xff]
    %v305 = vld [vmem:[#allocation10 + $0x18] sm:$0xff]
    %v306 = vld [vmem:[#allocation10 + $0x20] sm:$0xff]
    %v307 = vld [vmem:[#allocation10 + $0x28] sm:$0xff]
    %v308 = vld [vmem:[#allocation10 + $0x30] sm:$0xff]
    %v309 = vld [vmem:[#allocation10 + $0x38] sm:$0xff]
    %v310 = vld [vmem:[#allocation10 + $0x40] sm:$0xff]
    %v311 = vld [vmem:[#allocation10 + $0x48] sm:$0xff]
    %v312 = vld [vmem:[#allocation10 + $0x50] sm:$0xff]
    %v313 = vld [vmem:[#allocation10 + $0x58] sm:$0xff]
    %v314 = vld [vmem:[#allocation10 + $0x60] sm:$0xff]
    %v315 = vld [vmem:[#allocation10 + $0x68] sm:$0xff]
    %v316 = vld [vmem:[#allocation10 + $0x70] sm:$0xff]
    %v317 = vld [vmem:[#allocation10 + $0x78] sm:$0xff]
    %318 = vmatpush.msra.mxu0 %v317
    %319 = vmatpush.msra.mxu0 %v316
    %320 = vmatpush.msra.mxu0 %v315
    %321 = vmatpush.msra.mxu0 %v314
    %322 = vmatpush.msra.mxu0 %v313
    %323 = vmatpush.msra.mxu0 %v312
    %324 = vmatpush.msra.mxu0 %v311
    %325 = vmatpush.msra.mxu0 %v310
    %326 = vmatpush.msra.mxu0 %v309
    %327 = vmatpush.msra.mxu0 %v308
    %328 = vmatpush.msra.mxu0 %v307
    %329 = vmatpush.msra.mxu0 %v306
    %330 = vmatpush.msra.mxu0 %v305
    %331 = vmatpush.msra.mxu0 %v304
    %332 = vmatpush.msra.mxu0 %v303
    %333 = vmatpush.msra.mxu0 %v302
    %334 = vmatmul.f32.gmra.mxu0 %v299
    %v335 = vpop.f32.mrf.mxu0
    %v336 = vadd.f32 0.0, %v335
    %337 = vdwg.mxu0
    %s338 = scalar_lea.vmem [#allocation3], 6
    %v339 = vld [vmem:[%s338] sm:$0x3]
    %v340 = vadd.f32 %v339, %v336
    %v341 = vtanh.pop %v340
    %s342 = scalar_lea.vmem [#allocation12], 6
    %343 = vst [vmem:[%s342] sm:$0x3] %v341
    %v344 = vld [vmem:[#allocation10] sm:$0xff]
    %v345 = vld [vmem:[#allocation10 + $0x8] sm:$0xff]
    %v346 = vld [vmem:[#allocation10 + $0x10] sm:$0xff]
    %v347 = vld [vmem:[#allocation10 + $0x18] sm:$0xff]
    %v348 = vld [vmem:[#allocation10 + $0x20] sm:$0xff]
    %v349 = vld [vmem:[#allocation10 + $0x28] sm:$0xff]
    %v350 = vld [vmem:[#allocation10 + $0x30] sm:$0xff]
    %v351 = vld [vmem:[#allocation10 + $0x38] sm:$0xff]
    %v352 = vld [vmem:[#allocation10 + $0x40] sm:$0xff]
    %v353 = vld [vmem:[#allocation10 + $0x48] sm:$0xff]
    %v354 = vld [vmem:[#allocation10 + $0x50] sm:$0xff]
    %v355 = vld [vmem:[#allocation10 + $0x58] sm:$0xff]
    %v356 = vld [vmem:[#allocation10 + $0x60] sm:$0xff]
    %v357 = vld [vmem:[#allocation10 + $0x68] sm:$0xff]
    %v358 = vld [vmem:[#allocation10 + $0x70] sm:$0xff]
    %v359 = vld [vmem:[#allocation10 + $0x78] sm:$0xff]
    %360 = vmatpush.msra.mxu0 %v359
    %361 = vmatpush.msra.mxu0 %v358
    %362 = vmatpush.msra.mxu0 %v357
    %363 = vmatpush.msra.mxu0 %v356
    %364 = vmatpush.msra.mxu0 %v355
    %365 = vmatpush.msra.mxu0 %v354
    %366 = vmatpush.msra.mxu0 %v353
    %367 = vmatpush.msra.mxu0 %v352
    %368 = vmatpush.msra.mxu0 %v351
    %369 = vmatpush.msra.mxu0 %v350
    %370 = vmatpush.msra.mxu0 %v349
    %371 = vmatpush.msra.mxu0 %v348
    %372 = vmatpush.msra.mxu0 %v347
    %373 = vmatpush.msra.mxu0 %v346
    %374 = vmatpush.msra.mxu0 %v345
    %375 = vmatpush.msra.mxu0 %v344
    %376 = vmatmul.f32.gmra.mxu0 %v341
    %v377 = vpop.f32.mrf.mxu0
    %v378 = vadd.f32 0.0, %v377
    %379 = vdwg.mxu0
    %s380 = scalar_lea.vmem [#allocation3], 8
    %v381 = vld [vmem:[%s380] sm:$0x3]
    %v382 = vadd.f32 %v381, %v378
    %v383 = vtanh.pop %v382
    %s384 = scalar_lea.vmem [#allocation12], 8
    %385 = vst [vmem:[%s384] sm:$0x3] %v383
    %v386 = vld [vmem:[#allocation10] sm:$0xff]
    %v387 = vld [vmem:[#allocation10 + $0x8] sm:$0xff]
    %v388 = vld [vmem:[#allocation10 + $0x10] sm:$0xff]
    %v389 = vld [vmem:[#allocation10 + $0x18] sm:$0xff]
    %v390 = vld [vmem:[#allocation10 + $0x20] sm:$0xff]
    %v391 = vld [vmem:[#allocation10 + $0x28] sm:$0xff]
    %v392 = vld [vmem:[#allocation10 + $0x30] sm:$0xff]
    %v393 = vld [vmem:[#allocation10 + $0x38] sm:$0xff]
    %v394 = vld [vmem:[#allocation10 + $0x40] sm:$0xff]
    %v395 = vld [vmem:[#allocation10 + $0x48] sm:$0xff]
    %v396 = vld [vmem:[#allocation10 + $0x50] sm:$0xff]
    %v397 = vld [vmem:[#allocation10 + $0x58] sm:$0xff]
    %v398 = vld [vmem:[#allocation10 + $0x60] sm:$0xff]
    %v399 = vld [vmem:[#allocation10 + $0x68] sm:$0xff]
    %v400 = vld [vmem:[#allocation10 + $0x70] sm:$0xff]
    %v401 = vld [vmem:[#allocation10 + $0x78] sm:$0xff]
    %402 = vmatpush.msra.mxu0 %v401
    %403 = vmatpush.msra.mxu0 %v400
    %404 = vmatpush.msra.mxu0 %v399
    %405 = vmatpush.msra.mxu0 %v398
    %406 = vmatpush.msra.mxu0 %v397
    %407 = vmatpush.msra.mxu0 %v396
    %408 = vmatpush.msra.mxu0 %v395
    %409 = vmatpush.msra.mxu0 %v394
    %410 = vmatpush.msra.mxu0 %v393
    %411 = vmatpush.msra.mxu0 %v392
    %412 = vmatpush.msra.mxu0 %v391
    %413 = vmatpush.msra.mxu0 %v390
    %414 = vmatpush.msra.mxu0 %v389
    %415 = vmatpush.msra.mxu0 %v388
    %416 = vmatpush.msra.mxu0 %v387
    %417 = vmatpush.msra.mxu0 %v386
    %418 = vmatmul.f32.gmra.mxu0 %v383
    %v419 = vpop.f32.mrf.mxu0
    %v420 = vadd.f32 0.0, %v419
    %421 = vdwg.mxu0
    %s422 = scalar_lea.vmem [#allocation3], 10
    %v423 = vld [vmem:[%s422] sm:$0x3]
    %v424 = vadd.f32 %v423, %v420
    %v425 = vtanh.pop %v424
    %s426 = scalar_lea.vmem [#allocation12], 10
    %427 = vst [vmem:[%s426] sm:$0x3] %v425
    %v428 = vld [vmem:[#allocation10] sm:$0xff]
    %v429 = vld [vmem:[#allocation10 + $0x8] sm:$0xff]
    %v430 = vld [vmem:[#allocation10 + $0x10] sm:$0xff]
    %v431 = vld [vmem:[#allocation10 + $0x18] sm:$0xff]
    %v432 = vld [vmem:[#allocation10 + $0x20] sm:$0xff]
    %v433 = vld [vmem:[#allocation10 + $0x28] sm:$0xff]
    %v434 = vld [vmem:[#allocation10 + $0x30] sm:$0xff]
    %v435 = vld [vmem:[#allocation10 + $0x38] sm:$0xff]
    %v436 = vld [vmem:[#allocation10 + $0x40] sm:$0xff]
    %v437 = vld [vmem:[#allocation10 + $0x48] sm:$0xff]
    %v438 = vld [vmem:[#allocation10 + $0x50] sm:$0xff]
    %v439 = vld [vmem:[#allocation10 + $0x58] sm:$0xff]
    %v440 = vld [vmem:[#allocation10 + $0x60] sm:$0xff]
    %v441 = vld [vmem:[#allocation10 + $0x68] sm:$0xff]
    %v442 = vld [vmem:[#allocation10 + $0x70] sm:$0xff]
    %v443 = vld [vmem:[#allocation10 + $0x78] sm:$0xff]
    %444 = vmatpush.msra.mxu0 %v443
    %445 = vmatpush.msra.mxu0 %v442
    %446 = vmatpush.msra.mxu0 %v441
    %447 = vmatpush.msra.mxu0 %v440
    %448 = vmatpush.msra.mxu0 %v439
    %449 = vmatpush.msra.mxu0 %v438
    %450 = vmatpush.msra.mxu0 %v437
    %451 = vmatpush.msra.mxu0 %v436
    %452 = vmatpush.msra.mxu0 %v435
    %453 = vmatpush.msra.mxu0 %v434
    %454 = vmatpush.msra.mxu0 %v433
    %455 = vmatpush.msra.mxu0 %v432
    %456 = vmatpush.msra.mxu0 %v431
    %457 = vmatpush.msra.mxu0 %v430
    %458 = vmatpush.msra.mxu0 %v429
    %459 = vmatpush.msra.mxu0 %v428
    %460 = vmatmul.f32.gmra.mxu0 %v425
    %v461 = vpop.f32.mrf.mxu0
    %v462 = vadd.f32 0.0, %v461
    %463 = vdwg.mxu0
    %s464 = scalar_lea.vmem [#allocation3], 12
    %v465 = vld [vmem:[%s464] sm:$0x3]
    %v466 = vadd.f32 %v465, %v462
    %v467 = vtanh.pop %v466
    %s468 = scalar_lea.vmem [#allocation12], 12
    %469 = vst [vmem:[%s468] sm:$0x3] %v467
    %v470 = vld [vmem:[#allocation10] sm:$0xff]
    %v471 = vld [vmem:[#allocation10 + $0x8] sm:$0xff]
    %v472 = vld [vmem:[#allocation10 + $0x10] sm:$0xff]
    %v473 = vld [vmem:[#allocation10 + $0x18] sm:$0xff]
    %v474 = vld [vmem:[#allocation10 + $0x20] sm:$0xff]
    %v475 = vld [vmem:[#allocation10 + $0x28] sm:$0xff]
    %v476 = vld [vmem:[#allocation10 + $0x30] sm:$0xff]
    %v477 = vld [vmem:[#allocation10 + $0x38] sm:$0xff]
    %v478 = vld [vmem:[#allocation10 + $0x40] sm:$0xff]
    %v479 = vld [vmem:[#allocation10 + $0x48] sm:$0xff]
    %v480 = vld [vmem:[#allocation10 + $0x50] sm:$0xff]
    %v481 = vld [vmem:[#allocation10 + $0x58] sm:$0xff]
    %v482 = vld [vmem:[#allocation10 + $0x60] sm:$0xff]
    %v483 = vld [vmem:[#allocation10 + $0x68] sm:$0xff]
    %v484 = vld [vmem:[#allocation10 + $0x70] sm:$0xff]
    %v485 = vld [vmem:[#allocation10 + $0x78] sm:$0xff]
    %486 = vmatpush.msra.mxu0 %v485
    %487 = vmatpush.msra.mxu0 %v484
    %488 = vmatpush.msra.mxu0 %v483
    %489 = vmatpush.msra.mxu0 %v482
    %490 = vmatpush.msra.mxu0 %v481
    %491 = vmatpush.msra.mxu0 %v480
    %492 = vmatpush.msra.mxu0 %v479
    %493 = vmatpush.msra.mxu0 %v478
    %494 = vmatpush.msra.mxu0 %v477
    %495 = vmatpush.msra.mxu0 %v476
    %496 = vmatpush.msra.mxu0 %v475
    %497 = vmatpush.msra.mxu0 %v474
    %498 = vmatpush.msra.mxu0 %v473
    %499 = vmatpush.msra.mxu0 %v472
    %500 = vmatpush.msra.mxu0 %v471
    %501 = vmatpush.msra.mxu0 %v470
    %502 = vmatmul.f32.gmra.mxu0 %v467
    %v503 = vpop.f32.mrf.mxu0
    %v504 = vadd.f32 0.0, %v503
    %505 = vdwg.mxu0
    %s506 = scalar_lea.vmem [#allocation3], 14
    %v507 = vld [vmem:[%s506] sm:$0x3]
    %v508 = vadd.f32 %v507, %v504
    %v509 = vtanh.pop %v508
    %s510 = scalar_lea.vmem [#allocation12], 14
    %511 = vst [vmem:[%s510] sm:$0x3] %v509
    %512 = vst [vmem:[#allocation2] sm:$0x3] %v509
    // Predicated region
    $region42: #{tpu_custom_call.1} parent=1 // pred_check
      _
    $region43: #{tpu_custom_call.1} parent=1 // pred_check_branch
      %514 = sbr.rel (0) target = $region45
    $region44: #{tpu_custom_call.1} parent=1 // pred_region
      %516 = vsyncadd [#allocation6], 0
      %s517 = sshll.u32 [#allocation12], 4
      %s518 = int_to_ptr.vmem [resolvable:$true] %s517
      %s519 = sshll.u32 %s5, 4
      %s520 = int_to_ptr.hbm [resolvable:$true] %s519
      %525 = dma.vmem_to_hbm [thread:$0]  %s518, 256, %s520, [#allocation6], 32, 32, 2
    $region45: #{tpu_custom_call.1} parent=1 // pred_fallthru
      _
    // Predicated region
    $region46: #{tpu_custom_call.1} parent=1 // pred_check
      _
    $region47: #{tpu_custom_call.1} parent=1 // pred_check_branch
      %527 = sbr.rel (0) target = $region49
    $region48: #{tpu_custom_call.1} parent=1 // pred_region
      %529 = dma.done [#allocation6], 256
    $region49: #{tpu_custom_call.1} parent=1 // pred_fallthru
      _
    %530 = vsyncpa [#allocation5], 1
    %531 = vsyncpa [#allocation8], 1
    %532 = vsyncpa [#allocation11], 1
    %533 = vsyncpa [#allocation6], 1

// kernel: tpu_custom_call.1
$region0: #{tpu_custom_call.1}
  #allocation0 [shape = 'u32[]', space=smem, size = 0x4, offset = 0x4, fixed_abs, tag = 'smem constant byte address 0x4 - core index']
  #allocation1 [shape = 'u32[72,128]{1,0:T(1,128)}', space=vmem, size = 0x9000, scoped, tag = 'internal scratch']
  #allocation2 [shape = 'f32[2,128]{1,0:T(2,128)}', space=vmem, size = 0x400, scoped, tag = 'scratch operand']
  #allocation3 [shape = 'f32[8,2,128]{2,1,0:T(2,128)}', space=vmem, size = 0x2000, scoped, tag = 'scratch operand']
  %s0 = inlined_call_operand.hbm [shape: f32[8,2,16], index: 0, kind: input, shape index: {}]
  %s1 = inlined_call_operand.hbm [shape: f32[2,128], index: 1, kind: input, shape index: {}]
  %s2 = inlined_call_operand.hbm [shape: f32[16,128], index: 2, kind: input, shape index: {}]
  %s3 = inlined_call_operand.hbm [shape: f32[128,128], index: 3, kind: input, shape index: {}]
  %s4 = inlined_call_operand.vmem [shape: f32[1,128], index: 4, kind: input, shape index: {}]
  %s5 = inlined_call_operand.hbm [shape: f32[8,2,128], index: 5, kind: output, shape index: {}]
  %s6 = sld [smem:[#allocation0]]
  $region50: #{tpu_custom_call.1} parent=0
    _
  %s8 = ssub.s32 1, %s6
  %s9 = scalar_select 0, %s8, %s6
  $region1: #{tpu_custom_call.1} parent=0
    #allocation4 [shape = 'u8[8192]{0}', space=vmem, size = 0x2000, scoped, tag = 'input window, operand 0, single buffered']
    #allocation5 [shape = 's32[1]{0}', space=sflag, size = 0x4, scoped, tag = 'scoped memory for tpu_custom_call.1']
    #allocation6 [shape = 's32[1]{0}', space=sflag, size = 0x4, scoped, tag = 'scoped memory for tpu_custom_call.1']
    #allocation7 [shape = 'u8[1024]{0}', space=vmem, size = 0x400, scoped, tag = 'input window, operand 1, single buffered']
    #allocation8 [shape = 's32[1]{0}', space=sflag, size = 0x4, scoped, tag = 'scoped memory for tpu_custom_call.1']
    #allocation9 [shape = 'u8[8192]{0}', space=vmem, size = 0x2000, scoped, tag = 'input window, operand 2, single buffered']
    #allocation10 [shape = 'u8[65536]{0}', space=vmem, size = 0x10000, scoped, tag = 'input window, operand 3, single buffered']
    #allocation11 [shape = 's32[1]{0}', space=sflag, size = 0x4, scoped, tag = 'scoped memory for tpu_custom_call.1']
    #allocation12 [shape = 'u8[8192]{0}', space=vmem, size = 0x2000, scoped, tag = 'output window, operand 0, single buffered']
    %10 = vsyncpa [#allocation5], 0
    %11 = vsyncpa [#allocation8], 0
    %12 = vsyncpa [#allocation11], 0
    %13 = vsyncpa [#allocation6], 0
    // Predicated region
    $region2: #{tpu_custom_call.1} parent=1 // pred_check
      _
    $region3: #{tpu_custom_call.1} parent=1 // pred_check_branch
      %15 = sbr.rel (0) target = $region5
    $region4: #{tpu_custom_call.1} parent=1 // pred_region
      %17 = vsyncadd [#allocation5], 0
      %s18 = sshll.u32 %s0, 4
      %s19 = int_to_ptr.hbm [resolvable:$true] %s18
      %s20 = sshll.u32 [#allocation4], 4
      %s21 = int_to_ptr.vmem [resolvable:$true] %s20
      %26 = dma.hbm_to_vmem [thread:$0]  %s19, 256, %s21, [#allocation5], 32, 32, 2
    $region5: #{tpu_custom_call.1} parent=1 // pred_fallthru
      _
    // Predicated region
    $region6: #{tpu_custom_call.1} parent=1 // pred_check
      _
    $region7: #{tpu_custom_call.1} parent=1 // pred_check_branch
      %28 = sbr.rel (0) target = $region9
    $region8: #{tpu_custom_call.1} parent=1 // pred_region
      %30 = vsyncadd [#allocation8], 0
      %s32 = sshll.u32 %s1, 4
      %s33 = int_to_ptr.hbm [resolvable:$true] %s32
      %s34 = sshll.u32 [#allocation7], 4
      %s35 = int_to_ptr.vmem [resolvable:$true] %s34
      %37 = dma.hbm_to_vmem [thread:$0]  %s33, 32, %s35, [#allocation8]
    $region9: #{tpu_custom_call.1} parent=1 // pred_fallthru
      _
    // Predicated region
    $region10: #{tpu_custom_call.1} parent=1 // pred_check
      _
    $region11: #{tpu_custom_call.1} parent=1 // pred_check_branch
      %39 = sbr.rel (0) target = $region13
    $region12: #{tpu_custom_call.1} parent=1 // pred_region
      %41 = vsyncadd [#allocation8], 0
      %s42 = sshll.u32 %s2, 4
      %s43 = int_to_ptr.hbm [resolvable:$true] %s42
      %s44 = sshll.u32 [#allocation9], 4
      %s45 = int_to_ptr.vmem [resolvable:$true] %s44
      %50 = dma.hbm_to_vmem [thread:$0]  %s43, 256, %s45, [#allocation8], 128, 128, 8
    $region13: #{tpu_custom_call.1} parent=1 // pred_fallthru
      _
    // Predicated region
    $region14: #{tpu_custom_call.1} parent=1 // pred_check
      _
    $region15: #{tpu_custom_call.1} parent=1 // pred_check_branch
      %52 = sbr.rel (0) target = $region17
    $region16: #{tpu_custom_call.1} parent=1 // pred_region
      %54 = vsyncadd [#allocation11], 0
      %s55 = sshll.u32 %s3, 4
      %s56 = int_to_ptr.hbm [resolvable:$true] %s55
      %s57 = sshll.u32 [#allocation10], 4
      %s58 = int_to_ptr.vmem [resolvable:$true] %s57
      %63 = dma.hbm_to_vmem [thread:$0]  %s56, 2048, %s58, [#allocation11], 128, 128, 8
    $region17: #{tpu_custom_call.1} parent=1 // pred_fallthru
      _
    // Predicated region
    $region18: #{tpu_custom_call.1} parent=1 // pred_check
      _
    $region19: #{tpu_custom_call.1} parent=1 // pred_check_branch
      %65 = sbr.rel (0) target = $region21
    $region20: #{tpu_custom_call.1} parent=1 // pred_region
      _
    $region21: #{tpu_custom_call.1} parent=1 // pred_fallthru
      _
    // Predicated region
    $region22: #{tpu_custom_call.1} parent=1 // pred_check
      _
    $region23: #{tpu_custom_call.1} parent=1 // pred_check_branch
      %67 = sbr.rel (0) target = $region25
    $region24: #{tpu_custom_call.1} parent=1 // pred_region
      %69 = dma.done [#allocation5], 256
    $region25: #{tpu_custom_call.1} parent=1 // pred_fallthru
      _
    // Predicated region
    $region26: #{tpu_custom_call.1} parent=1 // pred_check
      _
    $region27: #{tpu_custom_call.1} parent=1 // pred_check_branch
      %71 = sbr.rel (0) target = $region29
    $region28: #{tpu_custom_call.1} parent=1 // pred_region
      %73 = dma.done [#allocation8], 32
    $region29: #{tpu_custom_call.1} parent=1 // pred_fallthru
      _
    // Predicated region
    $region30: #{tpu_custom_call.1} parent=1 // pred_check
      _
    $region31: #{tpu_custom_call.1} parent=1 // pred_check_branch
      %75 = sbr.rel (0) target = $region33
    $region32: #{tpu_custom_call.1} parent=1 // pred_region
      %77 = dma.done [#allocation8], 256
    $region33: #{tpu_custom_call.1} parent=1 // pred_fallthru
      _
    // Predicated region
    $region34: #{tpu_custom_call.1} parent=1 // pred_check
      _
    $region35: #{tpu_custom_call.1} parent=1 // pred_check_branch
      %79 = sbr.rel (0) target = $region37
    $region36: #{tpu_custom_call.1} parent=1 // pred_region
      %81 = dma.done [#allocation11], 2048
    $region37: #{tpu_custom_call.1} parent=1 // pred_fallthru
      _
    %p82 = scmp.eq.s32.totalorder 0, 0
    // Predicated region
    $region38: #{tpu_custom_call.1} parent=1 // pred_check
      %p83 = pneg %p82
    $region39: #{tpu_custom_call.1} parent=1 // pred_check_branch
      %85 = sbr.rel (%p83) target = $region41
    $region40: #{tpu_custom_call.1} parent=1 // pred_region
      %v86 = vld [vmem:[#allocation7] sm:$0x3]
      %87 = vst [vmem:[#allocation2] sm:$0x3] %v86
    $region41: #{tpu_custom_call.1} parent=1 // pred_fallthru
      _
    %v88 = vld [vmem:[#allocation4] sm:$0x3]
    %v89 = vld [vmem:[#allocation4 + $0x2] sm:$0x3]
    %v90 = vld [vmem:[#allocation4 + $0x4] sm:$0x3]
    %v91 = vld [vmem:[#allocation4 + $0x6] sm:$0x3]
    %v92 = vld [vmem:[#allocation4 + $0x8] sm:$0x3]
    %v93 = vld [vmem:[#allocation4 + $0xa] sm:$0x3]
    %v94 = vld [vmem:[#allocation4 + $0xc] sm:$0x3]
    %v95 = vld [vmem:[#allocation4 + $0xe] sm:$0x3]
    %v96 = vld [vmem:[#allocation9] sm:$0xff]
    %v97 = vld [vmem:[#allocation9 + $0x8] sm:$0xff]
    %v98 = vld [vmem:[%s4] sm:$0x1]
    %v100 = vperm.slane %v98, 0
    %110 = vst [vmem:[#allocation1] ss:$4 sm:$0xff] %v88
    %s111 = scalar_lea.vmem [#allocation1], 1
    %112 = vst [vmem:[%s111] ss:$4 sm:$0xff] %v89
    %s113 = scalar_lea.vmem [#allocation1], 2
    %114 = vst [vmem:[%s113] ss:$4 sm:$0xff] %v90
    %s115 = scalar_lea.vmem [#allocation1], 3
    %116 = vst [vmem:[%s115] ss:$4 sm:$0xff] %v91
    %s117 = scalar_lea.vmem [#allocation1], 32
    %118 = vst [vmem:[%s117] ss:$4 sm:$0xff] %v92
    %s119 = scalar_lea.vmem [#allocation1], 33
    %120 = vst [vmem:[%s119] ss:$4 sm:$0xff] %v93
    %s121 = scalar_lea.vmem [#allocation1], 34
    %122 = vst [vmem:[%s121] ss:$4 sm:$0xff] %v94
    %s123 = scalar_lea.vmem [#allocation1], 35
    %124 = vst [vmem:[%s123] ss:$4 sm:$0xff] %v95
    %v125 = vld.sshfl [vmem:[#allocation1] sm:$0xff pattern:$0x73625140]
    %v126 = vld.sshfl [vmem:[#allocation1 + $0x20] sm:$0xff pattern:$0x73625140]
    %vm127 = vcmask 130048
    %v128 = vsel %vm127, %v125, 0
    %v130 = vsel %vm127, %v126, 0
    %132 = vmatpush.msra.mxu0 0.0
    %133 = vmatpush.msra.mxu0 0.0
    %134 = vmatpush.msra.mxu0 0.0
    %135 = vmatpush.msra.mxu0 0.0
    %136 = vmatpush.msra.mxu0 0.0
    %137 = vmatpush.msra.mxu0 0.0
    %138 = vmatpush.msra.mxu0 0.0
    %139 = vmatpush.msra.mxu0 0.0
    %140 = vmatpush.msra.mxu0 0.0
    %141 = vmatpush.msra.mxu0 0.0
    %142 = vmatpush.msra.mxu0 0.0
    %143 = vmatpush.msra.mxu0 0.0
    %144 = vmatpush.msra.mxu0 0.0
    %145 = vmatpush.msra.mxu0 0.0
    %146 = vmatpush.msra.mxu0 %v97
    %147 = vmatpush.msra.mxu0 %v96
    %148 = vmatmul.f32.gmra.mxu0 %v128
    %v149 = vpop.f32.mrf.mxu0
    %v150 = vadd.f32 %v100, %v149
    %151 = vmatmul.f32.gmra.mxu0 %v130
    %v152 = vpop.f32.mrf.mxu0
    %v153 = vadd.f32 %v100, %v152
    %154 = vdwg.mxu0
    %v157 = vrot.slane %v150, 2
    %v158 = vrot.slane %v150, 4
    %v159 = vrot.slane %v150, 6
    %v160 = vrot.slane %v153, 2
    %v161 = vrot.slane %v153, 4
    %v162 = vrot.slane %v153, 6
    %169 = vst [vmem:[#allocation3] sm:$0x3] %v150
    %170 = vst [vmem:[#allocation3 + $0x2] sm:$0x3] %v157
    %171 = vst [vmem:[#allocation3 + $0x4] sm:$0x3] %v158
    %172 = vst [vmem:[#allocation3 + $0x6] sm:$0x3] %v159
    %173 = vst [vmem:[#allocation3 + $0x8] sm:$0x3] %v153
    %174 = vst [vmem:[#allocation3 + $0xa] sm:$0x3] %v160
    %175 = vst [vmem:[#allocation3 + $0xc] sm:$0x3] %v161
    %176 = vst [vmem:[#allocation3 + $0xe] sm:$0x3] %v162
    %v177 = vld [vmem:[#allocation2] sm:$0x3]
    %v178 = vld [vmem:[#allocation10] sm:$0xff]
    %v179 = vld [vmem:[#allocation10 + $0x8] sm:$0xff]
    %v180 = vld [vmem:[#allocation10 + $0x10] sm:$0xff]
    %v181 = vld [vmem:[#allocation10 + $0x18] sm:$0xff]
    %v182 = vld [vmem:[#allocation10 + $0x20] sm:$0xff]
    %v183 = vld [vmem:[#allocation10 + $0x28] sm:$0xff]
    %v184 = vld [vmem:[#allocation10 + $0x30] sm:$0xff]
    %v185 = vld [vmem:[#allocation10 + $0x38] sm:$0xff]
    %v186 = vld [vmem:[#allocation10 + $0x40] sm:$0xff]
    %v187 = vld [vmem:[#allocation10 + $0x48] sm:$0xff]
    %v188 = vld [vmem:[#allocation10 + $0x50] sm:$0xff]
    %v189 = vld [vmem:[#allocation10 + $0x58] sm:$0xff]
    %v190 = vld [vmem:[#allocation10 + $0x60] sm:$0xff]
    %v191 = vld [vmem:[#allocation10 + $0x68] sm:$0xff]
    %v192 = vld [vmem:[#allocation10 + $0x70] sm:$0xff]
    %v193 = vld [vmem:[#allocation10 + $0x78] sm:$0xff]
    %194 = vmatpush.msra.mxu0 %v193
    %195 = vmatpush.msra.mxu0 %v192
    %196 = vmatpush.msra.mxu0 %v191
    %197 = vmatpush.msra.mxu0 %v190
    %198 = vmatpush.msra.mxu0 %v189
    %199 = vmatpush.msra.mxu0 %v188
    %200 = vmatpush.msra.mxu0 %v187
    %201 = vmatpush.msra.mxu0 %v186
    %202 = vmatpush.msra.mxu0 %v185
    %203 = vmatpush.msra.mxu0 %v184
    %204 = vmatpush.msra.mxu0 %v183
    %205 = vmatpush.msra.mxu0 %v182
    %206 = vmatpush.msra.mxu0 %v181
    %207 = vmatpush.msra.mxu0 %v180
    %208 = vmatpush.msra.mxu0 %v179
    %209 = vmatpush.msra.mxu0 %v178
    %210 = vmatmul.f32.gmra.mxu0 %v177
    %v211 = vpop.f32.mrf.mxu0
    %v212 = vadd.f32 0.0, %v211
    %213 = vdwg.mxu0
    %v214 = vld [vmem:[#allocation3] sm:$0x3]
    %v215 = vadd.f32 %v214, %v212
    %v216 = vtanh.pop %v215
    %217 = vst [vmem:[#allocation12] sm:$0x3] %v216
    %v218 = vld [vmem:[#allocation10] sm:$0xff]
    %v219 = vld [vmem:[#allocation10 + $0x8] sm:$0xff]
    %v220 = vld [vmem:[#allocation10 + $0x10] sm:$0xff]
    %v221 = vld [vmem:[#allocation10 + $0x18] sm:$0xff]
    %v222 = vld [vmem:[#allocation10 + $0x20] sm:$0xff]
    %v223 = vld [vmem:[#allocation10 + $0x28] sm:$0xff]
    %v224 = vld [vmem:[#allocation10 + $0x30] sm:$0xff]
    %v225 = vld [vmem:[#allocation10 + $0x38] sm:$0xff]
    %v226 = vld [vmem:[#allocation10 + $0x40] sm:$0xff]
    %v227 = vld [vmem:[#allocation10 + $0x48] sm:$0xff]
    %v228 = vld [vmem:[#allocation10 + $0x50] sm:$0xff]
    %v229 = vld [vmem:[#allocation10 + $0x58] sm:$0xff]
    %v230 = vld [vmem:[#allocation10 + $0x60] sm:$0xff]
    %v231 = vld [vmem:[#allocation10 + $0x68] sm:$0xff]
    %v232 = vld [vmem:[#allocation10 + $0x70] sm:$0xff]
    %v233 = vld [vmem:[#allocation10 + $0x78] sm:$0xff]
    %234 = vmatpush.msra.mxu0 %v233
    %235 = vmatpush.msra.mxu0 %v232
    %236 = vmatpush.msra.mxu0 %v231
    %237 = vmatpush.msra.mxu0 %v230
    %238 = vmatpush.msra.mxu0 %v229
    %239 = vmatpush.msra.mxu0 %v228
    %240 = vmatpush.msra.mxu0 %v227
    %241 = vmatpush.msra.mxu0 %v226
    %242 = vmatpush.msra.mxu0 %v225
    %243 = vmatpush.msra.mxu0 %v224
    %244 = vmatpush.msra.mxu0 %v223
    %245 = vmatpush.msra.mxu0 %v222
    %246 = vmatpush.msra.mxu0 %v221
    %247 = vmatpush.msra.mxu0 %v220
    %248 = vmatpush.msra.mxu0 %v219
    %249 = vmatpush.msra.mxu0 %v218
    %250 = vmatmul.f32.gmra.mxu0 %v216
    %v251 = vpop.f32.mrf.mxu0
    %v252 = vadd.f32 0.0, %v251
    %253 = vdwg.mxu0
    %s254 = scalar_lea.vmem [#allocation3], 2
    %v255 = vld [vmem:[%s254] sm:$0x3]
    %v256 = vadd.f32 %v255, %v252
    %v257 = vtanh.pop %v256
    %s258 = scalar_lea.vmem [#allocation12], 2
    %259 = vst [vmem:[%s258] sm:$0x3] %v257
    %v260 = vld [vmem:[#allocation10] sm:$0xff]
    %v261 = vld [vmem:[#allocation10 + $0x8] sm:$0xff]
    %v262 = vld [vmem:[#allocation10 + $0x10] sm:$0xff]
    %v263 = vld [vmem:[#allocation10 + $0x18] sm:$0xff]
    %v264 = vld [vmem:[#allocation10 + $0x20] sm:$0xff]
    %v265 = vld [vmem:[#allocation10 + $0x28] sm:$0xff]
    %v266 = vld [vmem:[#allocation10 + $0x30] sm:$0xff]
    %v267 = vld [vmem:[#allocation10 + $0x38] sm:$0xff]
    %v268 = vld [vmem:[#allocation10 + $0x40] sm:$0xff]
    %v269 = vld [vmem:[#allocation10 + $0x48] sm:$0xff]
    %v270 = vld [vmem:[#allocation10 + $0x50] sm:$0xff]
    %v271 = vld [vmem:[#allocation10 + $0x58] sm:$0xff]
    %v272 = vld [vmem:[#allocation10 + $0x60] sm:$0xff]
    %v273 = vld [vmem:[#allocation10 + $0x68] sm:$0xff]
    %v274 = vld [vmem:[#allocation10 + $0x70] sm:$0xff]
    %v275 = vld [vmem:[#allocation10 + $0x78] sm:$0xff]
    %276 = vmatpush.msra.mxu0 %v275
    %277 = vmatpush.msra.mxu0 %v274
    %278 = vmatpush.msra.mxu0 %v273
    %279 = vmatpush.msra.mxu0 %v272
    %280 = vmatpush.msra.mxu0 %v271
    %281 = vmatpush.msra.mxu0 %v270
    %282 = vmatpush.msra.mxu0 %v269
    %283 = vmatpush.msra.mxu0 %v268
    %284 = vmatpush.msra.mxu0 %v267
    %285 = vmatpush.msra.mxu0 %v266
    %286 = vmatpush.msra.mxu0 %v265
    %287 = vmatpush.msra.mxu0 %v264
    %288 = vmatpush.msra.mxu0 %v263
    %289 = vmatpush.msra.mxu0 %v262
    %290 = vmatpush.msra.mxu0 %v261
    %291 = vmatpush.msra.mxu0 %v260
    %292 = vmatmul.f32.gmra.mxu0 %v257
    %v293 = vpop.f32.mrf.mxu0
    %v294 = vadd.f32 0.0, %v293
    %295 = vdwg.mxu0
    %s296 = scalar_lea.vmem [#allocation3], 4
    %v297 = vld [vmem:[%s296] sm:$0x3]
    %v298 = vadd.f32 %v297, %v294
    %v299 = vtanh.pop %v298
    %s300 = scalar_lea.vmem [#allocation12], 4
    %301 = vst [vmem:[%s300] sm:$0x3] %v299
    %v302 = vld [vmem:[#allocation10] sm:$0xff]
    %v303 = vld [vmem:[#allocation10 + $0x8] sm:$0xff]
    %v304 = vld [vmem:[#allocation10 + $0x10] sm:$0xff]
    %v305 = vld [vmem:[#allocation10 + $0x18] sm:$0xff]
    %v306 = vld [vmem:[#allocation10 + $0x20] sm:$0xff]
    %v307 = vld [vmem:[#allocation10 + $0x28] sm:$0xff]
    %v308 = vld [vmem:[#allocation10 + $0x30] sm:$0xff]
    %v309 = vld [vmem:[#allocation10 + $0x38] sm:$0xff]
    %v310 = vld [vmem:[#allocation10 + $0x40] sm:$0xff]
    %v311 = vld [vmem:[#allocation10 + $0x48] sm:$0xff]
    %v312 = vld [vmem:[#allocation10 + $0x50] sm:$0xff]
    %v313 = vld [vmem:[#allocation10 + $0x58] sm:$0xff]
    %v314 = vld [vmem:[#allocation10 + $0x60] sm:$0xff]
    %v315 = vld [vmem:[#allocation10 + $0x68] sm:$0xff]
    %v316 = vld [vmem:[#allocation10 + $0x70] sm:$0xff]
    %v317 = vld [vmem:[#allocation10 + $0x78] sm:$0xff]
    %318 = vmatpush.msra.mxu0 %v317
    %319 = vmatpush.msra.mxu0 %v316
    %320 = vmatpush.msra.mxu0 %v315
    %321 = vmatpush.msra.mxu0 %v314
    %322 = vmatpush.msra.mxu0 %v313
    %323 = vmatpush.msra.mxu0 %v312
    %324 = vmatpush.msra.mxu0 %v311
    %325 = vmatpush.msra.mxu0 %v310
    %326 = vmatpush.msra.mxu0 %v309
    %327 = vmatpush.msra.mxu0 %v308
    %328 = vmatpush.msra.mxu0 %v307
    %329 = vmatpush.msra.mxu0 %v306
    %330 = vmatpush.msra.mxu0 %v305
    %331 = vmatpush.msra.mxu0 %v304
    %332 = vmatpush.msra.mxu0 %v303
    %333 = vmatpush.msra.mxu0 %v302
    %334 = vmatmul.f32.gmra.mxu0 %v299
    %v335 = vpop.f32.mrf.mxu0
    %v336 = vadd.f32 0.0, %v335
    %337 = vdwg.mxu0
    %s338 = scalar_lea.vmem [#allocation3], 6
    %v339 = vld [vmem:[%s338] sm:$0x3]
    %v340 = vadd.f32 %v339, %v336
    %v341 = vtanh.pop %v340
    %s342 = scalar_lea.vmem [#allocation12], 6
    %343 = vst [vmem:[%s342] sm:$0x3] %v341
    %v344 = vld [vmem:[#allocation10] sm:$0xff]
    %v345 = vld [vmem:[#allocation10 + $0x8] sm:$0xff]
    %v346 = vld [vmem:[#allocation10 + $0x10] sm:$0xff]
    %v347 = vld [vmem:[#allocation10 + $0x18] sm:$0xff]
    %v348 = vld [vmem:[#allocation10 + $0x20] sm:$0xff]
    %v349 = vld [vmem:[#allocation10 + $0x28] sm:$0xff]
    %v350 = vld [vmem:[#allocation10 + $0x30] sm:$0xff]
    %v351 = vld [vmem:[#allocation10 + $0x38] sm:$0xff]
    %v352 = vld [vmem:[#allocation10 + $0x40] sm:$0xff]
    %v353 = vld [vmem:[#allocation10 + $0x48] sm:$0xff]
    %v354 = vld [vmem:[#allocation10 + $0x50] sm:$0xff]
    %v355 = vld [vmem:[#allocation10 + $0x58] sm:$0xff]
    %v356 = vld [vmem:[#allocation10 + $0x60] sm:$0xff]
    %v357 = vld [vmem:[#allocation10 + $0x68] sm:$0xff]
    %v358 = vld [vmem:[#allocation10 + $0x70] sm:$0xff]
    %v359 = vld [vmem:[#allocation10 + $0x78] sm:$0xff]
    %360 = vmatpush.msra.mxu0 %v359
    %361 = vmatpush.msra.mxu0 %v358
    %362 = vmatpush.msra.mxu0 %v357
    %363 = vmatpush.msra.mxu0 %v356
    %364 = vmatpush.msra.mxu0 %v355
    %365 = vmatpush.msra.mxu0 %v354
    %366 = vmatpush.msra.mxu0 %v353
    %367 = vmatpush.msra.mxu0 %v352
    %368 = vmatpush.msra.mxu0 %v351
    %369 = vmatpush.msra.mxu0 %v350
    %370 = vmatpush.msra.mxu0 %v349
    %371 = vmatpush.msra.mxu0 %v348
    %372 = vmatpush.msra.mxu0 %v347
    %373 = vmatpush.msra.mxu0 %v346
    %374 = vmatpush.msra.mxu0 %v345
    %375 = vmatpush.msra.mxu0 %v344
    %376 = vmatmul.f32.gmra.mxu0 %v341
    %v377 = vpop.f32.mrf.mxu0
    %v378 = vadd.f32 0.0, %v377
    %379 = vdwg.mxu0
    %s380 = scalar_lea.vmem [#allocation3], 8
    %v381 = vld [vmem:[%s380] sm:$0x3]
    %v382 = vadd.f32 %v381, %v378
    %v383 = vtanh.pop %v382
    %s384 = scalar_lea.vmem [#allocation12], 8
    %385 = vst [vmem:[%s384] sm:$0x3] %v383
    %v386 = vld [vmem:[#allocation10] sm:$0xff]
    %v387 = vld [vmem:[#allocation10 + $0x8] sm:$0xff]
    %v388 = vld [vmem:[#allocation10 + $0x10] sm:$0xff]
    %v389 = vld [vmem:[#allocation10 + $0x18] sm:$0xff]
    %v390 = vld [vmem:[#allocation10 + $0x20] sm:$0xff]
    %v391 = vld [vmem:[#allocation10 + $0x28] sm:$0xff]
    %v392 = vld [vmem:[#allocation10 + $0x30] sm:$0xff]
    %v393 = vld [vmem:[#allocation10 + $0x38] sm:$0xff]
    %v394 = vld [vmem:[#allocation10 + $0x40] sm:$0xff]
    %v395 = vld [vmem:[#allocation10 + $0x48] sm:$0xff]
    %v396 = vld [vmem:[#allocation10 + $0x50] sm:$0xff]
    %v397 = vld [vmem:[#allocation10 + $0x58] sm:$0xff]
    %v398 = vld [vmem:[#allocation10 + $0x60] sm:$0xff]
    %v399 = vld [vmem:[#allocation10 + $0x68] sm:$0xff]
    %v400 = vld [vmem:[#allocation10 + $0x70] sm:$0xff]
    %v401 = vld [vmem:[#allocation10 + $0x78] sm:$0xff]
    %402 = vmatpush.msra.mxu0 %v401
    %403 = vmatpush.msra.mxu0 %v400
    %404 = vmatpush.msra.mxu0 %v399
    %405 = vmatpush.msra.mxu0 %v398
    %406 = vmatpush.msra.mxu0 %v397
    %407 = vmatpush.msra.mxu0 %v396
    %408 = vmatpush.msra.mxu0 %v395
    %409 = vmatpush.msra.mxu0 %v394
    %410 = vmatpush.msra.mxu0 %v393
    %411 = vmatpush.msra.mxu0 %v392
    %412 = vmatpush.msra.mxu0 %v391
    %413 = vmatpush.msra.mxu0 %v390
    %414 = vmatpush.msra.mxu0 %v389
    %415 = vmatpush.msra.mxu0 %v388
    %416 = vmatpush.msra.mxu0 %v387
    %417 = vmatpush.msra.mxu0 %v386
    %418 = vmatmul.f32.gmra.mxu0 %v383
    %v419 = vpop.f32.mrf.mxu0
    %v420 = vadd.f32 0.0, %v419
    %421 = vdwg.mxu0
    %s422 = scalar_lea.vmem [#allocation3], 10
    %v423 = vld [vmem:[%s422] sm:$0x3]
    %v424 = vadd.f32 %v423, %v420
    %v425 = vtanh.pop %v424
    %s426 = scalar_lea.vmem [#allocation12], 10
    %427 = vst [vmem:[%s426] sm:$0x3] %v425
    %v428 = vld [vmem:[#allocation10] sm:$0xff]
    %v429 = vld [vmem:[#allocation10 + $0x8] sm:$0xff]
    %v430 = vld [vmem:[#allocation10 + $0x10] sm:$0xff]
    %v431 = vld [vmem:[#allocation10 + $0x18] sm:$0xff]
    %v432 = vld [vmem:[#allocation10 + $0x20] sm:$0xff]
    %v433 = vld [vmem:[#allocation10 + $0x28] sm:$0xff]
    %v434 = vld [vmem:[#allocation10 + $0x30] sm:$0xff]
    %v435 = vld [vmem:[#allocation10 + $0x38] sm:$0xff]
    %v436 = vld [vmem:[#allocation10 + $0x40] sm:$0xff]
    %v437 = vld [vmem:[#allocation10 + $0x48] sm:$0xff]
    %v438 = vld [vmem:[#allocation10 + $0x50] sm:$0xff]
    %v439 = vld [vmem:[#allocation10 + $0x58] sm:$0xff]
    %v440 = vld [vmem:[#allocation10 + $0x60] sm:$0xff]
    %v441 = vld [vmem:[#allocation10 + $0x68] sm:$0xff]
    %v442 = vld [vmem:[#allocation10 + $0x70] sm:$0xff]
    %v443 = vld [vmem:[#allocation10 + $0x78] sm:$0xff]
    %444 = vmatpush.msra.mxu0 %v443
    %445 = vmatpush.msra.mxu0 %v442
    %446 = vmatpush.msra.mxu0 %v441
    %447 = vmatpush.msra.mxu0 %v440
    %448 = vmatpush.msra.mxu0 %v439
    %449 = vmatpush.msra.mxu0 %v438
    %450 = vmatpush.msra.mxu0 %v437
    %451 = vmatpush.msra.mxu0 %v436
    %452 = vmatpush.msra.mxu0 %v435
    %453 = vmatpush.msra.mxu0 %v434
    %454 = vmatpush.msra.mxu0 %v433
    %455 = vmatpush.msra.mxu0 %v432
    %456 = vmatpush.msra.mxu0 %v431
    %457 = vmatpush.msra.mxu0 %v430
    %458 = vmatpush.msra.mxu0 %v429
    %459 = vmatpush.msra.mxu0 %v428
    %460 = vmatmul.f32.gmra.mxu0 %v425
    %v461 = vpop.f32.mrf.mxu0
    %v462 = vadd.f32 0.0, %v461
    %463 = vdwg.mxu0
    %s464 = scalar_lea.vmem [#allocation3], 12
    %v465 = vld [vmem:[%s464] sm:$0x3]
    %v466 = vadd.f32 %v465, %v462
    %v467 = vtanh.pop %v466
    %s468 = scalar_lea.vmem [#allocation12], 12
    %469 = vst [vmem:[%s468] sm:$0x3] %v467
    %v470 = vld [vmem:[#allocation10] sm:$0xff]
    %v471 = vld [vmem:[#allocation10 + $0x8] sm:$0xff]
    %v472 = vld [vmem:[#allocation10 + $0x10] sm:$0xff]
    %v473 = vld [vmem:[#allocation10 + $0x18] sm:$0xff]
    %v474 = vld [vmem:[#allocation10 + $0x20] sm:$0xff]
    %v475 = vld [vmem:[#allocation10 + $0x28] sm:$0xff]
    %v476 = vld [vmem:[#allocation10 + $0x30] sm:$0xff]
    %v477 = vld [vmem:[#allocation10 + $0x38] sm:$0xff]
    %v478 = vld [vmem:[#allocation10 + $0x40] sm:$0xff]
    %v479 = vld [vmem:[#allocation10 + $0x48] sm:$0xff]
    %v480 = vld [vmem:[#allocation10 + $0x50] sm:$0xff]
    %v481 = vld [vmem:[#allocation10 + $0x58] sm:$0xff]
    %v482 = vld [vmem:[#allocation10 + $0x60] sm:$0xff]
    %v483 = vld [vmem:[#allocation10 + $0x68] sm:$0xff]
    %v484 = vld [vmem:[#allocation10 + $0x70] sm:$0xff]
    %v485 = vld [vmem:[#allocation10 + $0x78] sm:$0xff]
    %486 = vmatpush.msra.mxu0 %v485
    %487 = vmatpush.msra.mxu0 %v484
    %488 = vmatpush.msra.mxu0 %v483
    %489 = vmatpush.msra.mxu0 %v482
    %490 = vmatpush.msra.mxu0 %v481
    %491 = vmatpush.msra.mxu0 %v480
    %492 = vmatpush.msra.mxu0 %v479
    %493 = vmatpush.msra.mxu0 %v478
    %494 = vmatpush.msra.mxu0 %v477
    %495 = vmatpush.msra.mxu0 %v476
    %496 = vmatpush.msra.mxu0 %v475
    %497 = vmatpush.msra.mxu0 %v474
    %498 = vmatpush.msra.mxu0 %v473
    %499 = vmatpush.msra.mxu0 %v472
    %500 = vmatpush.msra.mxu0 %v471
    %501 = vmatpush.msra.mxu0 %v470
    %502 = vmatmul.f32.gmra.mxu0 %v467
    %v503 = vpop.f32.mrf.mxu0
    %v504 = vadd.f32 0.0, %v503
    %505 = vdwg.mxu0
    %s506 = scalar_lea.vmem [#allocation3], 14
    %v507 = vld [vmem:[%s506] sm:$0x3]
    %v508 = vadd.f32 %v507, %v504
    %v509 = vtanh.pop %v508
    %s510 = scalar_lea.vmem [#allocation12], 14
    %511 = vst [vmem:[%s510] sm:$0x3] %v509
    %512 = vst [vmem:[#allocation2] sm:$0x3] %v509
    // Predicated region
    $region42: #{tpu_custom_call.1} parent=1 // pred_check
      _
    $region43: #{tpu_custom_call.1} parent=1 // pred_check_branch
      %514 = sbr.rel (0) target = $region45
    $region44: #{tpu_custom_call.1} parent=1 // pred_region
      %516 = vsyncadd [#allocation6], 0
      %s517 = sshll.u32 [#allocation12], 4
      %s518 = int_to_ptr.vmem [resolvable:$true] %s517
      %s519 = sshll.u32 %s5, 4
      %s520 = int_to_ptr.hbm [resolvable:$true] %s519
      %525 = dma.vmem_to_hbm [thread:$0]  %s518, 256, %s520, [#allocation6], 32, 32, 2
    $region45: #{tpu_custom_call.1} parent=1 // pred_fallthru
      _
    // Predicated region
    $region46: #{tpu_custom_call.1} parent=1 // pred_check
      _
    $region47: #{tpu_custom_call.1} parent=1 // pred_check_branch
      %527 = sbr.rel (0) target = $region49
    $region48: #{tpu_custom_call.1} parent=1 // pred_region
      %529 = dma.done [#allocation6], 256
    $region49: #{tpu_custom_call.1} parent=1 // pred_fallthru
      _
    %530 = vsyncpa [#allocation5], 1
    %531 = vsyncpa [#allocation8], 1
    %532 = vsyncpa [#allocation11], 1
    %533 = vsyncpa [#allocation6], 1

</llo_original>
